<compile_context>
chip_gen: v7x
topology: tpu7x:2x2x1
jax: 0.10.0
libtpu: 0.0.40
codegen_flags: <defaults>
</compile_context>

<pallas_src>
import math
import jax
import jax.numpy as jnp
from jax.experimental import pallas as pl
from jax.experimental.pallas import tpu as pltpu

# ---- small synthetic CLIP text-encoder config (mirrors CLIPTextModel structure) ----
VOCAB   = 100     # real: 49408
MAXLEN  = 8       # real: 77 (max_length)
D       = 32      # real: 768 (hidden)
H       = 4       # real: 12 (heads)
DH      = D // H
FF      = 4 * D   # real: 3072
NLAYERS = 2       # real: 12
BATCH   = 2
EPS     = 1e-5
M       = BATCH * MAXLEN   # rows fed to every matmul (batch merged into M)
NEG_INF = -1e9


# ----------------------------- kernel helpers ----------------------------------------
def _layer_norm(h, w, b):
    """One-pass LN statistics (E[x], E[x^2]) in f32."""
    mu = jnp.mean(h, axis=-1, keepdims=True)
    ms = jnp.mean(h * h, axis=-1, keepdims=True)
    var = ms - mu * mu
    return (h - mu) * jax.lax.rsqrt(var + EPS) * w + b


def _make_clip_encoder_kernel(collect_hidden):
    """One CLIP encoder layer per grid step; hidden state lives in VMEM across steps."""

    def kernel(x_in, bias,                                   # (M, D) embeddings, (S, S) causal bias
               ln1_w, ln1_b, wqkv, bqkv, wo, bo,             # stacked per-layer weights (bf16 mats)
               ln2_w, ln2_b, w1, b1, w2, b2,
               lnf_w, lnf_b,                                 # final LayerNorm params
               *outs_and_scratch):
        if collect_hidden:
            o_ref, hs_ref, x_scr = outs_and_scratch
        else:
            o_ref, x_scr = outs_and_scratch
            hs_ref = None

        layer = pl.program_id(0)

        @pl.when(layer == 0)
        def _():
            x_scr[...] = x_in[...].astype(jnp.float32)

        x = x_scr[...]                                       # (M, D) f32 residual stream

        # --- causal self-attention (pre-LN); fused QKV, 1/sqrt(DH) pre-folded into Wq ---
        h = _layer_norm(x, ln1_w[0], ln1_b[0])
        qkv = jnp.dot(h.astype(jnp.bfloat16), wqkv[0],
                      preferred_element_type=jnp.float32) + bqkv[0]      # (M, 3D) f32
        qkv3 = qkv.reshape(BATCH, MAXLEN, 3 * D)             # leading split, lanes unchanged
        q3 = qkv3[..., 0 * D:1 * D]
        k3 = qkv3[..., 1 * D:2 * D]
        v3 = qkv3[..., 2 * D:3 * D]

        # Stack heads onto the leading batch axis (major-dim concats only) so scores/PV are
        # two batched einsums and softmax runs once over all (head, batch) pairs.
        def split_heads(t):                                  # (B, S, D) -> (H*B, S, DH)
            return jnp.concatenate(
                [t[:, :, h0:h0 + DH] for h0 in range(0, D, DH)], axis=0)

        qh = split_heads(q3).astype(jnp.bfloat16)
        kh = split_heads(k3).astype(jnp.bfloat16)
        vh = split_heads(v3).astype(jnp.bfloat16)

        s = jnp.einsum('bqd,bkd->bqk', qh, kh,
                       preferred_element_type=jnp.float32)   # (H*B, S, S) f32
        s = s + bias[...]                                    # precomputed causal additive bias
        s = s - jnp.max(s, axis=-1, keepdims=True)
        p = jnp.exp(s)
        p = p * pl.reciprocal(jnp.sum(p, axis=-1, keepdims=True), approx=True)
        oh = jnp.einsum('bqk,bkd->bqd', p.astype(jnp.bfloat16), vh,
                        preferred_element_type=jnp.float32)  # (H*B, S, DH) f32

        attn = jnp.concatenate([oh[i * BATCH:(i + 1) * BATCH] for i in range(H)],
                               axis=-1).reshape(M, D)        # (M, D)
        attn = jnp.dot(attn.astype(jnp.bfloat16), wo[0],
                       preferred_element_type=jnp.float32) + bo[0]
        x = x + attn

        # --- MLP (pre-LN, quick_gelu) ---
        h2 = _layer_norm(x, ln2_w[0], ln2_b[0])
        f = jnp.dot(h2.astype(jnp.bfloat16), w1[0],
                    preferred_element_type=jnp.float32) + b1[0]          # (M, FF) f32
        f = f * jax.nn.sigmoid(1.702 * f)                                # quick_gelu
        f = jnp.dot(f.astype(jnp.bfloat16), w2[0],
                    preferred_element_type=jnp.float32) + b2[0]
        x = x + f

        x_scr[...] = x                       # stays resident in VMEM for the next layer
        if collect_hidden:
            hs_ref[0] = x.astype(hs_ref.dtype)   # HF hidden_states[layer+1] (pre final LN)

        @pl.when(layer == pl.num_programs(0) - 1)            # fold final LN into last step
        def _():
            o_ref[...] = _layer_norm(x, lnf_w[...], lnf_b[...]).astype(o_ref.dtype)

    return kernel


def _vmem_limit_bytes():
    """~80% of physical VMEM, capped at 100 MiB (v7x: ~53 MiB; v5e/v6e: 100 MiB)."""
    cap = 128 * 1024 * 1024
    try:
        cap = int(getattr(pltpu.get_tpu_info(), "vmem_capacity_bytes", cap)) or cap
    except Exception:
        pass
    return min(int(cap * 0.8), 100 * 1024 * 1024)


# ----------------------------- wrapper ----------------------------------------------
def clip_text_encoder(x_emb, params, collect_hidden=False):
    """All encoder layers + final LayerNorm in a single pallas_call.

    x_emb: (B, S, D) embeddings.
    Returns (last_hidden (B, S, D), hidden_states (NLAYERS, B, S, D) or None)."""
    B, S, Dm = x_emb.shape
    m = B * S
    x2 = x_emb.reshape(m, Dm)

    bf16 = jnp.bfloat16
    stacked = [
        params["ln1_w"], params["ln1_b"],
        params["wqkv"].astype(bf16), params["bqkv"],
        params["wo"].astype(bf16), params["bo"],
        params["ln2_w"], params["ln2_b"],
        params["w1"].astype(bf16), params["b1"],
        params["w2"].astype(bf16), params["b2"],
    ]
    lnf_w, lnf_b = params["ln_f_w"], params["ln_f_b"]

    # Causal additive bias hoisted out of the per-layer kernel body.
    idx = jnp.arange(S)
    attn_bias = jnp.where(idx[None, :] <= idx[:, None], 0.0, NEG_INF).astype(jnp.float32)

    def stacked_spec(p):   # one layer slab per grid step (double-buffered weight stream)
        nd = p.ndim
        return pl.BlockSpec((1,) + p.shape[1:], lambda l, _nd=nd: (l,) + (0,) * (_nd - 1))

    def const_spec(p):     # same (full) block every step -> DMA'd once
        nd = p.ndim
        return pl.BlockSpec(p.shape, lambda l, _nd=nd: (0,) * _nd)

    # TODO(synk): x2 / attn_bias VMEM blocks stay resident for all NLAYERS steps even though x2
    # is only read at layer 0; on a very tight v7x budget they could be DMA'd once from pl.ANY.
    in_specs = ([const_spec(x2), const_spec(attn_bias)]
                + [stacked_spec(p) for p in stacked]
                + [const_spec(lnf_w), const_spec(lnf_b)])

    # advisory cost hint for XLA's scheduler
    flops_layer = (2 * m * Dm * 3 * Dm          # fused QKV projection
                   + 2 * m * Dm * Dm            # out projection
                   + 4 * m * Dm * FF            # MLP
                   + 4 * B * H * S * S * DH)    # QK^T + PV
    transcend = NLAYERS * (B * H * S * S + m * FF)
    nbytes = lambda a: a.size * a.dtype.itemsize
    bytes_acc = int(nbytes(x2) + nbytes(attn_bias)
                    + sum(nbytes(p) for p in stacked)
                    + nbytes(lnf_w) + nbytes(lnf_b)
                    + m * Dm * 4
                    + (NLAYERS * m * Dm * 4 if collect_hidden else 0))
    cost = pl.CostEstimate(flops=NLAYERS * flops_layer,
                           transcendentals=transcend,
                           bytes_accessed=bytes_acc)

    if collect_hidden:
        out_shape = (jax.ShapeDtypeStruct((m, Dm), x_emb.dtype),
                     jax.ShapeDtypeStruct((NLAYERS, m, Dm), x_emb.dtype))
        out_specs = (pl.BlockSpec((m, Dm), lambda l: (0, 0)),
                     pl.BlockSpec((1, m, Dm), lambda l: (l, 0, 0)))
    else:
        out_shape = jax.ShapeDtypeStruct((m, Dm), x_emb.dtype)
        out_specs = pl.BlockSpec((m, Dm), lambda l: (0, 0))

    out = pl.pallas_call(
        _make_clip_encoder_kernel(collect_hidden),
        out_shape=out_shape,
        grid=(NLAYERS,),
        in_specs=in_specs,
        out_specs=out_specs,
        scratch_shapes=[pltpu.VMEM((m, Dm), jnp.float32)],
        compiler_params=pltpu.CompilerParams(
            dimension_semantics=("arbitrary",),     # layer axis carries the x_scr recurrence
            vmem_limit_bytes=_vmem_limit_bytes()),
        cost_estimate=cost,
    )(x2, attn_bias, *stacked, lnf_w, lnf_b)

    if collect_hidden:
        last, hs = out
        return last.reshape(B, S, Dm), hs.reshape(NLAYERS, B, S, Dm)
    return out.reshape(B, S, Dm), None


# ----------------------------- parameters & forward ----------------------------------
def init_params(key):
    k_tok, k_pos, k_qkv, k_o, k_1, k_2 = jax.random.split(key, 6)

    attn_scale = 1.0 / math.sqrt(DH)
    wqkv = 0.02 * jax.random.normal(k_qkv, (NLAYERS, D, 3 * D), jnp.float32)
    # fold the 1/sqrt(head_dim) attention scale into the Q projection (bias is zero)
    wqkv = wqkv.at[:, :, :D].multiply(attn_scale)

    return {
        "tok_emb": 0.02 * jax.random.normal(k_tok, (VOCAB, D), jnp.float32),
        "pos_emb": 0.01 * jax.random.normal(k_pos, (MAXLEN, D), jnp.float32),
        "ln1_w": jnp.ones((NLAYERS, 1, D), jnp.float32),
        "ln1_b": jnp.zeros((NLAYERS, 1, D), jnp.float32),
        "wqkv": wqkv,
        "bqkv": jnp.zeros((NLAYERS, 1, 3 * D), jnp.float32),
        "wo": 0.02 * jax.random.normal(k_o, (NLAYERS, D, D), jnp.float32),
        "bo": jnp.zeros((NLAYERS, 1, D), jnp.float32),
        "ln2_w": jnp.ones((NLAYERS, 1, D), jnp.float32),
        "ln2_b": jnp.zeros((NLAYERS, 1, D), jnp.float32),
        "w1": 0.02 * jax.random.normal(k_1, (NLAYERS, D, FF), jnp.float32),
        "b1": jnp.zeros((NLAYERS, 1, FF), jnp.float32),
        "w2": 0.02 * jax.random.normal(k_2, (NLAYERS, FF, D), jnp.float32),
        "b2": jnp.zeros((NLAYERS, 1, D), jnp.float32),
        "ln_f_w": jnp.ones((1, D), jnp.float32),
        "ln_f_b": jnp.zeros((1, D), jnp.float32),
    }


def frozen_clip_embedder_forward(tokens, params, layer="last", layer_idx=None):
    """FrozenCLIPEmbedder.forward, consuming already-tokenized ids (B, MAXLEN) int32."""
    # TODO(synk): the HuggingFace CLIPTokenizer (raw text -> padded int32 ids) has no
    # Pallas/TPU equivalent; this forward takes token ids directly.
    B, S = tokens.shape
    x = jnp.take(params["tok_emb"], tokens, axis=0) + params["pos_emb"][None, :S, :]
    collect_hidden = (layer == "hidden")
    last_hidden, hs = clip_text_encoder(x, params, collect_hidden=collect_hidden)

    if layer == "last":
        return last_hidden                    # (B, S, D) == outputs.last_hidden_state
    elif layer == "hidden":
        assert layer_idx is not None
        hidden_states = [x] + [hs[i] for i in range(NLAYERS)]   # HF hidden_states list
        return hidden_states[layer_idx]
    else:  # 'pooled': hidden at EOS position (HF uses argmax of ids since EOS is vocab max)
        eos = jnp.argmax(tokens, axis=-1)
        return last_hidden[jnp.arange(B), eos][:, None, :]


if __name__ == "__main__":
    key = jax.random.PRNGKey(0)
    k_param, k_tok = jax.random.split(key)
    params = init_params(k_param)
    tokens = jax.random.randint(k_tok, (BATCH, MAXLEN), 0, VOCAB, dtype=jnp.int32)

    z = frozen_clip_embedder_forward(tokens, params, layer="last")
    z = jax.block_until_ready(z)
    assert z.shape == (BATCH, MAXLEN, D) and z.dtype == jnp.float32
    assert bool(jnp.all(jnp.isfinite(z)))
    print("KERNEL_OK")
</pallas_src>

<mosaic_0001>
module attributes {stable_mosaic.version = 11 : i64} {
  func.func @kernel(%arg0: i32, %arg1: memref<16x32xf32, #tpu.memory_space<vmem>>, %arg2: memref<8x8xf32, #tpu.memory_space<vmem>>, %arg3: memref<1x1x32xf32, #tpu.memory_space<vmem>>, %arg4: memref<1x1x32xf32, #tpu.memory_space<vmem>>, %arg5: memref<1x32x96xbf16, #tpu.memory_space<vmem>>, %arg6: memref<1x1x96xf32, #tpu.memory_space<vmem>>, %arg7: memref<1x32x32xbf16, #tpu.memory_space<vmem>>, %arg8: memref<1x1x32xf32, #tpu.memory_space<vmem>>, %arg9: memref<1x1x32xf32, #tpu.memory_space<vmem>>, %arg10: memref<1x1x32xf32, #tpu.memory_space<vmem>>, %arg11: memref<1x32x128xbf16, #tpu.memory_space<vmem>>, %arg12: memref<1x1x128xf32, #tpu.memory_space<vmem>>, %arg13: memref<1x128x32xbf16, #tpu.memory_space<vmem>>, %arg14: memref<1x1x32xf32, #tpu.memory_space<vmem>>, %arg15: memref<1x32xf32, #tpu.memory_space<vmem>>, %arg16: memref<1x32xf32, #tpu.memory_space<vmem>>, %arg17: memref<16x32xf32, #tpu.memory_space<vmem>>, %arg18: memref<16x32xf32, #tpu.memory_space<vmem>>) attributes {dimension_semantics = [#tpu.dimension_semantics<arbitrary>], iteration_bounds = array<i64: 2>, scalar_prefetch = 0 : i64, scratch_operands = 1 : i64, tpu.core_type = #tpu.core_type<tc>, window_params = [{pipeline_mode = #tpu.pipeline_mode<synchronous>, transform_indices = @transform_0, window_bounds = array<i64: 16, 32>}, {pipeline_mode = #tpu.pipeline_mode<synchronous>, transform_indices = @transform_1, window_bounds = array<i64: 8, 8>}, {transform_indices = @transform_2, window_bounds = array<i64: 1, 1, 32>}, {transform_indices = @transform_3, window_bounds = array<i64: 1, 1, 32>}, {transform_indices = @transform_4, window_bounds = array<i64: 1, 32, 96>}, {transform_indices = @transform_5, window_bounds = array<i64: 1, 1, 96>}, {transform_indices = @transform_6, window_bounds = array<i64: 1, 32, 32>}, {transform_indices = @transform_7, window_bounds = array<i64: 1, 1, 32>}, {transform_indices = @transform_8, window_bounds = array<i64: 1, 1, 32>}, {transform_indices = @transform_9, window_bounds = array<i64: 1, 1, 32>}, {transform_indices = @transform_10, window_bounds = array<i64: 1, 32, 128>}, {transform_indices = @transform_11, window_bounds = array<i64: 1, 1, 128>}, {transform_indices = @transform_12, window_bounds = array<i64: 1, 128, 32>}, {transform_indices = @transform_13, window_bounds = array<i64: 1, 1, 32>}, {pipeline_mode = #tpu.pipeline_mode<synchronous>, transform_indices = @transform_14, window_bounds = array<i64: 1, 32>}, {pipeline_mode = #tpu.pipeline_mode<synchronous>, transform_indices = @transform_15, window_bounds = array<i64: 1, 32>}, {pipeline_mode = #tpu.pipeline_mode<synchronous>, transform_indices = @transform_16, window_bounds = array<i64: 16, 32>}]} {
    %c0_i32 = arith.constant 0 : i32
    %0 = arith.cmpi eq, %arg0, %c0_i32 : i32
    %1 = arith.extui %0 : i1 to i32
    %c0_i32_0 = arith.constant 0 : i32
    %2 = arith.cmpi ne, %1, %c0_i32_0 : i32
    scf.if %2 {
      %c0_62 = arith.constant 0 : index
      %c0_63 = arith.constant 0 : index
      %147 = vector.load %arg1[%c0_62, %c0_63] : memref<16x32xf32, #tpu.memory_space<vmem>>, vector<16x32xf32>
      %c0_64 = arith.constant 0 : index
      %c0_65 = arith.constant 0 : index
      %148 = vector.load %arg18[%c0_64, %c0_65] : memref<16x32xf32, #tpu.memory_space<vmem>>, vector<16x32xf32>
      tpu.vector_store %arg18[%c0_64, %c0_65], %147 {strides = array<i32>} : memref<16x32xf32, #tpu.memory_space<vmem>>, vector<16x32xf32>,
    } else {
    }
    %c0 = arith.constant 0 : index
    %c0_1 = arith.constant 0 : index
    %3 = vector.load %arg18[%c0, %c0_1] : memref<16x32xf32, #tpu.memory_space<vmem>>, vector<16x32xf32>
    %c0_2 = arith.constant 0 : index
    %c0_3 = arith.constant 0 : index
    %c0_4 = arith.constant 0 : index
    %4 = vector.load %arg3[%c0_2, %c0_3, %c0_4] : memref<1x1x32xf32, #tpu.memory_space<vmem>>, vector<1x1x32xf32>
    %5 = vector.shape_cast %4 : vector<1x1x32xf32> to vector<1x32xf32>
    %c0_5 = arith.constant 0 : index
    %c0_6 = arith.constant 0 : index
    %c0_7 = arith.constant 0 : index
    %6 = vector.load %arg4[%c0_5, %c0_6, %c0_7] : memref<1x1x32xf32, #tpu.memory_space<vmem>>, vector<1x1x32xf32>
    %7 = vector.shape_cast %6 : vector<1x1x32xf32> to vector<1x32xf32>
    %cst = arith.constant dense<0.000000e+00> : vector<16xf32>
    %8 = vector.multi_reduction <add>, %3, %cst [1] : vector<16x32xf32> to vector<16xf32>
    %9 = vector.shape_cast %8 : vector<16xf32> to vector<16x1xf32>
    %cst_8 = arith.constant 3.200000e+01 : f32
    %10 = vector.broadcast %cst_8 : f32 to vector<16x1xf32>
    %11 = arith.divf %9, %10 : vector<16x1xf32>
    %12 = arith.mulf %3, %3 : vector<16x32xf32>
    %cst_9 = arith.constant dense<0.000000e+00> : vector<16xf32>
    %13 = vector.multi_reduction <add>, %12, %cst_9 [1] : vector<16x32xf32> to vector<16xf32>
    %14 = vector.shape_cast %13 : vector<16xf32> to vector<16x1xf32>
    %cst_10 = arith.constant 3.200000e+01 : f32
    %15 = vector.broadcast %cst_10 : f32 to vector<16x1xf32>
    %16 = arith.divf %14, %15 : vector<16x1xf32>
    %17 = arith.mulf %11, %11 : vector<16x1xf32>
    %18 = arith.subf %16, %17 : vector<16x1xf32>
    %19 = vector.broadcast %11 : vector<16x1xf32> to vector<16x32xf32>
    %20 = arith.subf %3, %19 : vector<16x32xf32>
    %cst_11 = arith.constant 9.99999974E-6 : f32
    %21 = vector.broadcast %cst_11 : f32 to vector<16x1xf32>
    %22 = arith.addf %18, %21 : vector<16x1xf32>
    %23 = math.rsqrt %22 : vector<16x1xf32>
    %24 = vector.broadcast %23 : vector<16x1xf32> to vector<16x32xf32>
    %25 = arith.mulf %20, %24 : vector<16x32xf32>
    %26 = vector.broadcast %5 : vector<1x32xf32> to vector<16x32xf32>
    %27 = arith.mulf %25, %26 : vector<16x32xf32>
    %28 = vector.broadcast %7 : vector<1x32xf32> to vector<16x32xf32>
    %29 = arith.addf %27, %28 : vector<16x32xf32>
    %30 = arith.truncf %29 : vector<16x32xf32> to vector<16x32xbf16>
    %c0_12 = arith.constant 0 : index
    %c0_13 = arith.constant 0 : index
    %c0_14 = arith.constant 0 : index
    %31 = vector.load %arg5[%c0_12, %c0_13, %c0_14] : memref<1x32x96xbf16, #tpu.memory_space<vmem>>, vector<1x32x96xbf16>
    %32 = vector.shape_cast %31 : vector<1x32x96xbf16> to vector<32x96xbf16>
    %cst_15 = arith.constant dense<0.000000e+00> : vector<16x96xf32>
    %33 = tpu.matmul %30, %32, %cst_15 {dimension_numbers = #tpu.dot_dimension_numbers<[1], [0], [0], [1], [0, 0, 1, 1], [], []>} : vector<16x32xbf16>, vector<32x96xbf16>, vector<16x96xf32> -> vector<16x96xf32>
    %c0_16 = arith.constant 0 : index
    %c0_17 = arith.constant 0 : index
    %c0_18 = arith.constant 0 : index
    %34 = vector.load %arg6[%c0_16, %c0_17, %c0_18] : memref<1x1x96xf32, #tpu.memory_space<vmem>>, vector<1x1x96xf32>
    %35 = vector.shape_cast %34 : vector<1x1x96xf32> to vector<1x96xf32>
    %36 = vector.broadcast %35 : vector<1x96xf32> to vector<16x96xf32>
    %37 = arith.addf %33, %36 : vector<16x96xf32>
    %38 = vector.shape_cast %37 : vector<16x96xf32> to vector<2x8x96xf32>
    %39 = vector.extract_strided_slice %38 {offsets = [0, 0, 0], sizes = [2, 8, 32], strides = [1, 1, 1]} : vector<2x8x96xf32> to vector<2x8x32xf32>
    %40 = vector.extract_strided_slice %38 {offsets = [0, 0, 32], sizes = [2, 8, 32], strides = [1, 1, 1]} : vector<2x8x96xf32> to vector<2x8x32xf32>
    %41 = vector.extract_strided_slice %38 {offsets = [0, 0, 64], sizes = [2, 8, 32], strides = [1, 1, 1]} : vector<2x8x96xf32> to vector<2x8x32xf32>
    %42 = vector.extract_strided_slice %39 {offsets = [0, 0, 0], sizes = [2, 8, 8], strides = [1, 1, 1]} : vector<2x8x32xf32> to vector<2x8x8xf32>
    %43 = vector.extract_strided_slice %39 {offsets = [0, 0, 8], sizes = [2, 8, 8], strides = [1, 1, 1]} : vector<2x8x32xf32> to vector<2x8x8xf32>
    %44 = vector.extract_strided_slice %39 {offsets = [0, 0, 16], sizes = [2, 8, 8], strides = [1, 1, 1]} : vector<2x8x32xf32> to vector<2x8x8xf32>
    %45 = vector.extract_strided_slice %39 {offsets = [0, 0, 24], sizes = [2, 8, 8], strides = [1, 1, 1]} : vector<2x8x32xf32> to vector<2x8x8xf32>
    %46 = tpu.concatenate %42, %43, %44, %45 in 0 : vector<2x8x8xf32>, vector<2x8x8xf32>, vector<2x8x8xf32>, vector<2x8x8xf32> -> vector<8x8x8xf32>
    %47 = arith.truncf %46 : vector<8x8x8xf32> to vector<8x8x8xbf16>
    %48 = vector.extract_strided_slice %40 {offsets = [0, 0, 0], sizes = [2, 8, 8], strides = [1, 1, 1]} : vector<2x8x32xf32> to vector<2x8x8xf32>
    %49 = vector.extract_strided_slice %40 {offsets = [0, 0, 8], sizes = [2, 8, 8], strides = [1, 1, 1]} : vector<2x8x32xf32> to vector<2x8x8xf32>
    %50 = vector.extract_strided_slice %40 {offsets = [0, 0, 16], sizes = [2, 8, 8], strides = [1, 1, 1]} : vector<2x8x32xf32> to vector<2x8x8xf32>
    %51 = vector.extract_strided_slice %40 {offsets = [0, 0, 24], sizes = [2, 8, 8], strides = [1, 1, 1]} : vector<2x8x32xf32> to vector<2x8x8xf32>
    %52 = tpu.concatenate %48, %49, %50, %51 in 0 : vector<2x8x8xf32>, vector<2x8x8xf32>, vector<2x8x8xf32>, vector<2x8x8xf32> -> vector<8x8x8xf32>
    %53 = arith.truncf %52 : vector<8x8x8xf32> to vector<8x8x8xbf16>
    %54 = vector.extract_strided_slice %41 {offsets = [0, 0, 0], sizes = [2, 8, 8], strides = [1, 1, 1]} : vector<2x8x32xf32> to vector<2x8x8xf32>
    %55 = vector.extract_strided_slice %41 {offsets = [0, 0, 8], sizes = [2, 8, 8], strides = [1, 1, 1]} : vector<2x8x32xf32> to vector<2x8x8xf32>
    %56 = vector.extract_strided_slice %41 {offsets = [0, 0, 16], sizes = [2, 8, 8], strides = [1, 1, 1]} : vector<2x8x32xf32> to vector<2x8x8xf32>
    %57 = vector.extract_strided_slice %41 {offsets = [0, 0, 24], sizes = [2, 8, 8], strides = [1, 1, 1]} : vector<2x8x32xf32> to vector<2x8x8xf32>
    %58 = tpu.concatenate %54, %55, %56, %57 in 0 : vector<2x8x8xf32>, vector<2x8x8xf32>, vector<2x8x8xf32>, vector<2x8x8xf32> -> vector<8x8x8xf32>
    %59 = arith.truncf %58 : vector<8x8x8xf32> to vector<8x8x8xbf16>
    "tpu.trace_start"() <{level = 10 : i32, message = "bqd,bkd->bqk"}> : () -> ()
    %cst_19 = arith.constant dense<0.000000e+00> : vector<8x8x8xf32>
    %60 = tpu.matmul %47, %53, %cst_19 {dimension_numbers = #tpu.dot_dimension_numbers<[2], [2], [1], [1], [0, 0, 0, 1, 1, 1], [0], [0]>} : vector<8x8x8xbf16>, vector<8x8x8xbf16>, vector<8x8x8xf32> -> vector<8x8x8xf32>
    "tpu.trace_stop"() : () -> ()
    %c0_20 = arith.constant 0 : index
    %c0_21 = arith.constant 0 : index
    %61 = vector.load %arg2[%c0_20, %c0_21] : memref<8x8xf32, #tpu.memory_space<vmem>>, vector<8x8xf32>
    %62 = vector.shape_cast %61 : vector<8x8xf32> to vector<1x8x8xf32>
    %63 = vector.broadcast %62 : vector<1x8x8xf32> to vector<8x8x8xf32>
    %64 = arith.addf %60, %63 : vector<8x8x8xf32>
    %cst_22 = arith.constant dense<0xFF800000> : vector<8x8xf32>
    %65 = vector.multi_reduction <maximumf>, %64, %cst_22 [2] : vector<8x8x8xf32> to vector<8x8xf32>
    %66 = vector.shape_cast %65 : vector<8x8xf32> to vector<8x8x1xf32>
    %67 = vector.broadcast %66 : vector<8x8x1xf32> to vector<8x8x8xf32>
    %68 = arith.subf %64, %67 : vector<8x8x8xf32>
    %69 = math.exp %68 : vector<8x8x8xf32>
    %cst_23 = arith.constant dense<0.000000e+00> : vector<8x8xf32>
    %70 = vector.multi_reduction <add>, %69, %cst_23 [2] : vector<8x8x8xf32> to vector<8x8xf32>
    %71 = vector.shape_cast %70 : vector<8x8xf32> to vector<8x8x1xf32>
    %72 = tpu.reciprocal %71 {approx = true} : vector<8x8x1xf32> -> vector<8x8x1xf32>
    %73 = vector.broadcast %72 : vector<8x8x1xf32> to vector<8x8x8xf32>
    %74 = arith.mulf %69, %73 : vector<8x8x8xf32>
    %75 = arith.truncf %74 : vector<8x8x8xf32> to vector<8x8x8xbf16>
    "tpu.trace_start"() <{level = 10 : i32, message = "bqk,bkd->bqd"}> : () -> ()
    %cst_24 = arith.constant dense<0.000000e+00> : vector<8x8x8xf32>
    %76 = tpu.matmul %75, %59, %cst_24 {dimension_numbers = #tpu.dot_dimension_numbers<[2], [1], [1], [2], [0, 0, 0, 1, 1, 2], [0], [0]>} : vector<8x8x8xbf16>, vector<8x8x8xbf16>, vector<8x8x8xf32> -> vector<8x8x8xf32>
    "tpu.trace_stop"() : () -> ()
    %77 = vector.extract_strided_slice %76 {offsets = [0, 0, 0], sizes = [2, 8, 8], strides = [1, 1, 1]} : vector<8x8x8xf32> to vector<2x8x8xf32>
    %78 = vector.extract_strided_slice %76 {offsets = [2, 0, 0], sizes = [2, 8, 8], strides = [1, 1, 1]} : vector<8x8x8xf32> to vector<2x8x8xf32>
    %79 = vector.extract_strided_slice %76 {offsets = [4, 0, 0], sizes = [2, 8, 8], strides = [1, 1, 1]} : vector<8x8x8xf32> to vector<2x8x8xf32>
    %80 = vector.extract_strided_slice %76 {offsets = [6, 0, 0], sizes = [2, 8, 8], strides = [1, 1, 1]} : vector<8x8x8xf32> to vector<2x8x8xf32>
    %81 = tpu.concatenate %77, %78, %79, %80 in 2 : vector<2x8x8xf32>, vector<2x8x8xf32>, vector<2x8x8xf32>, vector<2x8x8xf32> -> vector<2x8x32xf32>
    %82 = vector.shape_cast %81 : vector<2x8x32xf32> to vector<16x32xf32>
    %83 = arith.truncf %82 : vector<16x32xf32> to vector<16x32xbf16>
    %c0_25 = arith.constant 0 : index
    %c0_26 = arith.constant 0 : index
    %c0_27 = arith.constant 0 : index
    %84 = vector.load %arg7[%c0_25, %c0_26, %c0_27] : memref<1x32x32xbf16, #tpu.memory_space<vmem>>, vector<1x32x32xbf16>
    %85 = vector.shape_cast %84 : vector<1x32x32xbf16> to vector<32x32xbf16>
    %cst_28 = arith.constant dense<0.000000e+00> : vector<16x32xf32>
    %86 = tpu.matmul %83, %85, %cst_28 {dimension_numbers = #tpu.dot_dimension_numbers<[1], [0], [0], [1], [0, 0, 1, 1], [], []>} : vector<16x32xbf16>, vector<32x32xbf16>, vector<16x32xf32> -> vector<16x32xf32>
    %c0_29 = arith.constant 0 : index
    %c0_30 = arith.constant 0 : index
    %c0_31 = arith.constant 0 : index
    %87 = vector.load %arg8[%c0_29, %c0_30, %c0_31] : memref<1x1x32xf32, #tpu.memory_space<vmem>>, vector<1x1x32xf32>
    %88 = vector.shape_cast %87 : vector<1x1x32xf32> to vector<1x32xf32>
    %89 = vector.broadcast %88 : vector<1x32xf32> to vector<16x32xf32>
    %90 = arith.addf %86, %89 : vector<16x32xf32>
    %91 = arith.addf %3, %90 : vector<16x32xf32>
    %c0_32 = arith.constant 0 : index
    %c0_33 = arith.constant 0 : index
    %c0_34 = arith.constant 0 : index
    %92 = vector.load %arg9[%c0_32, %c0_33, %c0_34] : memref<1x1x32xf32, #tpu.memory_space<vmem>>, vector<1x1x32xf32>
    %93 = vector.shape_cast %92 : vector<1x1x32xf32> to vector<1x32xf32>
    %c0_35 = arith.constant 0 : index
    %c0_36 = arith.constant 0 : index
    %c0_37 = arith.constant 0 : index
    %94 = vector.load %arg10[%c0_35, %c0_36, %c0_37] : memref<1x1x32xf32, #tpu.memory_space<vmem>>, vector<1x1x32xf32>
    %95 = vector.shape_cast %94 : vector<1x1x32xf32> to vector<1x32xf32>
    %cst_38 = arith.constant dense<0.000000e+00> : vector<16xf32>
    %96 = vector.multi_reduction <add>, %91, %cst_38 [1] : vector<16x32xf32> to vector<16xf32>
    %97 = vector.shape_cast %96 : vector<16xf32> to vector<16x1xf32>
    %cst_39 = arith.constant 3.200000e+01 : f32
    %98 = vector.broadcast %cst_39 : f32 to vector<16x1xf32>
    %99 = arith.divf %97, %98 : vector<16x1xf32>
    %100 = arith.mulf %91, %91 : vector<16x32xf32>
    %cst_40 = arith.constant dense<0.000000e+00> : vector<16xf32>
    %101 = vector.multi_reduction <add>, %100, %cst_40 [1] : vector<16x32xf32> to vector<16xf32>
    %102 = vector.shape_cast %101 : vector<16xf32> to vector<16x1xf32>
    %cst_41 = arith.constant 3.200000e+01 : f32
    %103 = vector.broadcast %cst_41 : f32 to vector<16x1xf32>
    %104 = arith.divf %102, %103 : vector<16x1xf32>
    %105 = arith.mulf %99, %99 : vector<16x1xf32>
    %106 = arith.subf %104, %105 : vector<16x1xf32>
    %107 = vector.broadcast %99 : vector<16x1xf32> to vector<16x32xf32>
    %108 = arith.subf %91, %107 : vector<16x32xf32>
    %cst_42 = arith.constant 9.99999974E-6 : f32
    %109 = vector.broadcast %cst_42 : f32 to vector<16x1xf32>
    %110 = arith.addf %106, %109 : vector<16x1xf32>
    %111 = math.rsqrt %110 : vector<16x1xf32>
    %112 = vector.broadcast %111 : vector<16x1xf32> to vector<16x32xf32>
    %113 = arith.mulf %108, %112 : vector<16x32xf32>
    %114 = vector.broadcast %93 : vector<1x32xf32> to vector<16x32xf32>
    %115 = arith.mulf %113, %114 : vector<16x32xf32>
    %116 = vector.broadcast %95 : vector<1x32xf32> to vector<16x32xf32>
    %117 = arith.addf %115, %116 : vector<16x32xf32>
    %118 = arith.truncf %117 : vector<16x32xf32> to vector<16x32xbf16>
    %c0_43 = arith.constant 0 : index
    %c0_44 = arith.constant 0 : index
    %c0_45 = arith.constant 0 : index
    %119 = vector.load %arg11[%c0_43, %c0_44, %c0_45] : memref<1x32x128xbf16, #tpu.memory_space<vmem>>, vector<1x32x128xbf16>
    %120 = vector.shape_cast %119 : vector<1x32x128xbf16> to vector<32x128xbf16>
    %cst_46 = arith.constant dense<0.000000e+00> : vector<16x128xf32>
    %121 = tpu.matmul %118, %120, %cst_46 {dimension_numbers = #tpu.dot_dimension_numbers<[1], [0], [0], [1], [0, 0, 1, 1], [], []>} : vector<16x32xbf16>, vector<32x128xbf16>, vector<16x128xf32> -> vector<16x128xf32>
    %c0_47 = arith.constant 0 : index
    %c0_48 = arith.constant 0 : index
    %c0_49 = arith.constant 0 : index
    %122 = vector.load %arg12[%c0_47, %c0_48, %c0_49] : memref<1x1x128xf32, #tpu.memory_space<vmem>>, vector<1x1x128xf32>
    %123 = vector.shape_cast %122 : vector<1x1x128xf32> to vector<1x128xf32>
    %124 = vector.broadcast %123 : vector<1x128xf32> to vector<16x128xf32>
    %125 = arith.addf %121, %124 : vector<16x128xf32>
    %cst_50 = arith.constant 1.702000e+00 : f32
    %126 = vector.broadcast %cst_50 : f32 to vector<16x128xf32>
    %127 = arith.mulf %126, %125 : vector<16x128xf32>
    %128 = arith.negf %127 : vector<16x128xf32>
    %129 = math.exp %128 : vector<16x128xf32>
    %cst_51 = arith.constant 1.000000e+00 : f32
    %130 = vector.broadcast %cst_51 : f32 to vector<16x128xf32>
    %131 = arith.addf %130, %129 : vector<16x128xf32>
    %132 = arith.divf %130, %131 : vector<16x128xf32>
    %133 = arith.mulf %125, %132 : vector<16x128xf32>
    %134 = arith.truncf %133 : vector<16x128xf32> to vector<16x128xbf16>
    %c0_52 = arith.constant 0 : index
    %c0_53 = arith.constant 0 : index
    %c0_54 = arith.constant 0 : index
    %135 = vector.load %arg13[%c0_52, %c0_53, %c0_54] : memref<1x128x32xbf16, #tpu.memory_space<vmem>>, vector<1x128x32xbf16>
    %136 = vector.shape_cast %135 : vector<1x128x32xbf16> to vector<128x32xbf16>
    %cst_55 = arith.constant dense<0.000000e+00> : vector<16x32xf32>
    %137 = tpu.matmul %134, %136, %cst_55 {dimension_numbers = #tpu.dot_dimension_numbers<[1], [0], [0], [1], [0, 0, 1, 1], [], []>} : vector<16x128xbf16>, vector<128x32xbf16>, vector<16x32xf32> -> vector<16x32xf32>
    %c0_56 = arith.constant 0 : index
    %c0_57 = arith.constant 0 : index
    %c0_58 = arith.constant 0 : index
    %138 = vector.load %arg14[%c0_56, %c0_57, %c0_58] : memref<1x1x32xf32, #tpu.memory_space<vmem>>, vector<1x1x32xf32>
    %139 = vector.shape_cast %138 : vector<1x1x32xf32> to vector<1x32xf32>
    %140 = vector.broadcast %139 : vector<1x32xf32> to vector<16x32xf32>
    %141 = arith.addf %137, %140 : vector<16x32xf32>
    %142 = arith.addf %91, %141 : vector<16x32xf32>
    %c0_59 = arith.constant 0 : index
    %c0_60 = arith.constant 0 : index
    %143 = vector.load %arg18[%c0_59, %c0_60] : memref<16x32xf32, #tpu.memory_space<vmem>>, vector<16x32xf32>
    tpu.vector_store %arg18[%c0_59, %c0_60], %142 {strides = array<i32>} : memref<16x32xf32, #tpu.memory_space<vmem>>, vector<16x32xf32>,
    %c1_i32 = arith.constant 1 : i32
    %144 = arith.cmpi eq, %arg0, %c1_i32 : i32
    %145 = arith.extui %144 : i1 to i32
    %c0_i32_61 = arith.constant 0 : i32
    %146 = arith.cmpi ne, %145, %c0_i32_61 : i32
    scf.if %146 {
      %c0_62 = arith.constant 0 : index
      %c0_63 = arith.constant 0 : index
      %147 = vector.load %arg15[%c0_62, %c0_63] : memref<1x32xf32, #tpu.memory_space<vmem>>, vector<1x32xf32>
      %c0_64 = arith.constant 0 : index
      %c0_65 = arith.constant 0 : index
      %148 = vector.load %arg16[%c0_64, %c0_65] : memref<1x32xf32, #tpu.memory_space<vmem>>, vector<1x32xf32>
      %cst_66 = arith.constant dense<0.000000e+00> : vector<16xf32>
      %149 = vector.multi_reduction <add>, %142, %cst_66 [1] : vector<16x32xf32> to vector<16xf32>
      %150 = vector.shape_cast %149 : vector<16xf32> to vector<16x1xf32>
      %cst_67 = arith.constant 3.200000e+01 : f32
      %151 = vector.broadcast %cst_67 : f32 to vector<16x1xf32>
      %152 = arith.divf %150, %151 : vector<16x1xf32>
      %153 = arith.mulf %142, %142 : vector<16x32xf32>
      %cst_68 = arith.constant dense<0.000000e+00> : vector<16xf32>
      %154 = vector.multi_reduction <add>, %153, %cst_68 [1] : vector<16x32xf32> to vector<16xf32>
      %155 = vector.shape_cast %154 : vector<16xf32> to vector<16x1xf32>
      %cst_69 = arith.constant 3.200000e+01 : f32
      %156 = vector.broadcast %cst_69 : f32 to vector<16x1xf32>
      %157 = arith.divf %155, %156 : vector<16x1xf32>
      %158 = arith.mulf %152, %152 : vector<16x1xf32>
      %159 = arith.subf %157, %158 : vector<16x1xf32>
      %160 = vector.broadcast %152 : vector<16x1xf32> to vector<16x32xf32>
      %161 = arith.subf %142, %160 : vector<16x32xf32>
      %cst_70 = arith.constant 9.99999974E-6 : f32
      %162 = vector.broadcast %cst_70 : f32 to vector<16x1xf32>
      %163 = arith.addf %159, %162 : vector<16x1xf32>
      %164 = math.rsqrt %163 : vector<16x1xf32>
      %165 = vector.broadcast %164 : vector<16x1xf32> to vector<16x32xf32>
      %166 = arith.mulf %161, %165 : vector<16x32xf32>
      %167 = vector.broadcast %147 : vector<1x32xf32> to vector<16x32xf32>
      %168 = arith.mulf %166, %167 : vector<16x32xf32>
      %169 = vector.broadcast %148 : vector<1x32xf32> to vector<16x32xf32>
      %170 = arith.addf %168, %169 : vector<16x32xf32>
      %c0_71 = arith.constant 0 : index
      %c0_72 = arith.constant 0 : index
      %171 = vector.load %arg17[%c0_71, %c0_72] : memref<16x32xf32, #tpu.memory_space<vmem>>, vector<16x32xf32>
      tpu.vector_store %arg17[%c0_71, %c0_72], %170 {strides = array<i32>} : memref<16x32xf32, #tpu.memory_space<vmem>>, vector<16x32xf32>,
    } else {
    }
    return
  }
  func.func @transform_0(%arg0: i32) -> (i32, i32) {
    %c0_i32 = arith.constant 0 : i32
    %c0_i32_0 = arith.constant 0 : i32
    %c0_i32_1 = arith.constant 0 : i32
    return %c0_i32, %c0_i32_0 : i32, i32
  }
  func.func @transform_1(%arg0: i32) -> (i32, i32) {
    %c0_i32 = arith.constant 0 : i32
    %c0_i32_0 = arith.constant 0 : i32
    %c0_i32_1 = arith.constant 0 : i32
    return %c0_i32, %c0_i32_0 : i32, i32
  }
  func.func @transform_2(%arg0: i32) -> (i32, i32, i32) {
    %c0_i32 = arith.constant 0 : i32
    %c0_i32_0 = arith.constant 0 : i32
    %c0_i32_1 = arith.constant 0 : i32
    return %arg0, %c0_i32, %c0_i32_0 : i32, i32, i32
  }
  func.func @transform_3(%arg0: i32) -> (i32, i32, i32) {
    %c0_i32 = arith.constant 0 : i32
    %c0_i32_0 = arith.constant 0 : i32
    %c0_i32_1 = arith.constant 0 : i32
    return %arg0, %c0_i32, %c0_i32_0 : i32, i32, i32
  }
  func.func @transform_4(%arg0: i32) -> (i32, i32, i32) {
    %c0_i32 = arith.constant 0 : i32
    %c0_i32_0 = arith.constant 0 : i32
    %c0_i32_1 = arith.constant 0 : i32
    return %arg0, %c0_i32, %c0_i32_0 : i32, i32, i32
  }
  func.func @transform_5(%arg0: i32) -> (i32, i32, i32) {
    %c0_i32 = arith.constant 0 : i32
    %c0_i32_0 = arith.constant 0 : i32
    %c0_i32_1 = arith.constant 0 : i32
    return %arg0, %c0_i32, %c0_i32_0 : i32, i32, i32
  }
  func.func @transform_6(%arg0: i32) -> (i32, i32, i32) {
    %c0_i32 = arith.constant 0 : i32
    %c0_i32_0 = arith.constant 0 : i32
    %c0_i32_1 = arith.constant 0 : i32
    return %arg0, %c0_i32, %c0_i32_0 : i32, i32, i32
  }
  func.func @transform_7(%arg0: i32) -> (i32, i32, i32) {
    %c0_i32 = arith.constant 0 : i32
    %c0_i32_0 = arith.constant 0 : i32
    %c0_i32_1 = arith.constant 0 : i32
    return %arg0, %c0_i32, %c0_i32_0 : i32, i32, i32
  }
  func.func @transform_8(%arg0: i32) -> (i32, i32, i32) {
    %c0_i32 = arith.constant 0 : i32
    %c0_i32_0 = arith.constant 0 : i32
    %c0_i32_1 = arith.constant 0 : i32
    return %arg0, %c0_i32, %c0_i32_0 : i32, i32, i32
  }
  func.func @transform_9(%arg0: i32) -> (i32, i32, i32) {
    %c0_i32 = arith.constant 0 : i32
    %c0_i32_0 = arith.constant 0 : i32
    %c0_i32_1 = arith.constant 0 : i32
    return %arg0, %c0_i32, %c0_i32_0 : i32, i32, i32
  }
  func.func @transform_10(%arg0: i32) -> (i32, i32, i32) {
    %c0_i32 = arith.constant 0 : i32
    %c0_i32_0 = arith.constant 0 : i32
    %c0_i32_1 = arith.constant 0 : i32
    return %arg0, %c0_i32, %c0_i32_0 : i32, i32, i32
  }
  func.func @transform_11(%arg0: i32) -> (i32, i32, i32) {
    %c0_i32 = arith.constant 0 : i32
    %c0_i32_0 = arith.constant 0 : i32
    %c0_i32_1 = arith.constant 0 : i32
    return %arg0, %c0_i32, %c0_i32_0 : i32, i32, i32
  }
  func.func @transform_12(%arg0: i32) -> (i32, i32, i32) {
    %c0_i32 = arith.constant 0 : i32
    %c0_i32_0 = arith.constant 0 : i32
    %c0_i32_1 = arith.constant 0 : i32
    return %arg0, %c0_i32, %c0_i32_0 : i32, i32, i32
  }
  func.func @transform_13(%arg0: i32) -> (i32, i32, i32) {
    %c0_i32 = arith.constant 0 : i32
    %c0_i32_0 = arith.constant 0 : i32
    %c0_i32_1 = arith.constant 0 : i32
    return %arg0, %c0_i32, %c0_i32_0 : i32, i32, i32
  }
  func.func @transform_14(%arg0: i32) -> (i32, i32) {
    %c0_i32 = arith.constant 0 : i32
    %c0_i32_0 = arith.constant 0 : i32
    %c0_i32_1 = arith.constant 0 : i32
    return %c0_i32, %c0_i32_0 : i32, i32
  }
  func.func @transform_15(%arg0: i32) -> (i32, i32) {
    %c0_i32 = arith.constant 0 : i32
    %c0_i32_0 = arith.constant 0 : i32
    %c0_i32_1 = arith.constant 0 : i32
    return %c0_i32, %c0_i32_0 : i32, i32
  }
  func.func @transform_16(%arg0: i32) -> (i32, i32) {
    %c0_i32 = arith.constant 0 : i32
    %c0_i32_0 = arith.constant 0 : i32
    %c0_i32_1 = arith.constant 0 : i32
    return %c0_i32, %c0_i32_0 : i32, i32
  }
}

</mosaic_0001>

<llo_original>
// kernel: tpu_custom_call.1
$region0: #{tpu_custom_call.1}
  #allocation0 [shape = 'u32[]', space=smem, size = 0x4, offset = 0x4, fixed_abs, tag = 'smem constant byte address 0x4 - core index']
  #allocation1 [shape = 'u32[144,128]{1,0:T(1,128)}', space=vmem, size = 0x12000, scoped, tag = 'internal scratch']
  #allocation2 [shape = 'f32[16,32]{1,0:T(8,128)}', space=vmem, size = 0x2000, scoped, tag = 'scratch operand']
  %s0 = inlined_call_operand.hbm [shape: f32[16,32], index: 0, kind: input, shape index: {}]
  %s1 = inlined_call_operand.hbm [shape: f32[8,8], index: 1, kind: input, shape index: {}]
  %s2 = inlined_call_operand.hbm [shape: f32[2,1,32], index: 2, kind: input, shape index: {}]
  %s3 = inlined_call_operand.hbm [shape: f32[2,1,32], index: 3, kind: input, shape index: {}]
  %s4 = inlined_call_operand.hbm [shape: bf16[2,32,96], index: 4, kind: input, shape index: {}]
  %s5 = inlined_call_operand.hbm [shape: f32[2,1,96], index: 5, kind: input, shape index: {}]
  %s6 = inlined_call_operand.hbm [shape: bf16[2,32,32], index: 6, kind: input, shape index: {}]
  %s7 = inlined_call_operand.hbm [shape: f32[2,1,32], index: 7, kind: input, shape index: {}]
  %s8 = inlined_call_operand.hbm [shape: f32[2,1,32], index: 8, kind: input, shape index: {}]
  %s9 = inlined_call_operand.hbm [shape: f32[2,1,32], index: 9, kind: input, shape index: {}]
  %s10 = inlined_call_operand.hbm [shape: bf16[2,32,128], index: 10, kind: input, shape index: {}]
  %s11 = inlined_call_operand.hbm [shape: f32[2,1,128], index: 11, kind: input, shape index: {}]
  %s12 = inlined_call_operand.hbm [shape: bf16[2,128,32], index: 12, kind: input, shape index: {}]
  %s13 = inlined_call_operand.hbm [shape: f32[2,1,32], index: 13, kind: input, shape index: {}]
  %s14 = inlined_call_operand.hbm [shape: f32[1,32], index: 14, kind: input, shape index: {}]
  %s15 = inlined_call_operand.hbm [shape: f32[1,32], index: 15, kind: input, shape index: {}]
  %s16 = inlined_call_operand.hbm [shape: f32[16,32], index: 16, kind: output, shape index: {}]
  %s17 = sld [smem:[#allocation0]]
  $region169: #{tpu_custom_call.1} parent=0
    _
  %s19 = ssub.s32 1, %s17
  %s20 = scalar_select 0, %s19, %s17
  $region1: #{tpu_custom_call.1} parent=0
    #allocation3 [shape = 'u8[8192]{0}', space=vmem, size = 0x2000, scoped, tag = 'input window, operand 0, single buffered']
    #allocation4 [shape = 's32[2]{0}', space=sflag, size = 0x8, scoped, tag = 'scoped memory for tpu_custom_call.1']
    #allocation5 [shape = 's32[2]{0}', space=sflag, size = 0x8, scoped, tag = 'scoped memory for tpu_custom_call.1']
    #allocation6 [shape = 'u8[4096]{0}', space=vmem, size = 0x1000, scoped, tag = 'input window, operand 1, single buffered']
    #allocation7 [shape = 's32[1]{0}', space=sflag, size = 0x4, scoped, tag = 'scoped memory for tpu_custom_call.1']
    #allocation8 [shape = 'u8[1024]{0}', space=vmem, size = 0x400, scoped, tag = 'input window, operand 2']
    #allocation9 [shape = 'u8[1024]{0}', space=vmem, size = 0x400, scoped, tag = 'input window, operand 3']
    #allocation10 [shape = 'u8[16384]{0}', space=vmem, size = 0x4000, scoped, tag = 'input window, operand 4']
    #allocation11 [shape = 'u8[1024]{0}', space=vmem, size = 0x400, scoped, tag = 'input window, operand 5']
    #allocation12 [shape = 'u8[16384]{0}', space=vmem, size = 0x4000, scoped, tag = 'input window, operand 6']
    #allocation13 [shape = 'u8[1024]{0}', space=vmem, size = 0x400, scoped, tag = 'input window, operand 7']
    #allocation14 [shape = 'u8[1024]{0}', space=vmem, size = 0x400, scoped, tag = 'input window, operand 8']
    #allocation15 [shape = 'u8[1024]{0}', space=vmem, size = 0x400, scoped, tag = 'input window, operand 9']
    #allocation16 [shape = 'u8[16384]{0}', space=vmem, size = 0x4000, scoped, tag = 'input window, operand 10']
    #allocation17 [shape = 'u8[1024]{0}', space=vmem, size = 0x400, scoped, tag = 'input window, operand 11']
    #allocation18 [shape = 'u8[65536]{0}', space=vmem, size = 0x10000, scoped, tag = 'input window, operand 12']
    #allocation19 [shape = 'u8[1024]{0}', space=vmem, size = 0x400, scoped, tag = 'input window, operand 13']
    #allocation20 [shape = 'u8[512]{0}', space=vmem, size = 0x400, scoped, tag = 'input window, operand 14, single buffered']
    #allocation21 [shape = 'u8[512]{0}', space=vmem, size = 0x400, scoped, tag = 'input window, operand 15, single buffered']
    #allocation22 [shape = 's32[1]{0}', space=sflag, size = 0x4, scoped, tag = 'scoped memory for tpu_custom_call.1']
    #allocation23 [shape = 'u8[8192]{0}', space=vmem, size = 0x2000, scoped, tag = 'output window, operand 0, single buffered']
    %21 = vsyncpa [#allocation4], 0
    %22 = vsyncpa [#allocation7], 0
    %23 = vsyncpa [#allocation22], 0
    %24 = vsyncpa [#allocation5], 0
    loop: start=0, step=1, limit=4
    $region2: #{tpu_custom_call.1} parent=1 // loop_pre_header
      _
    $region3: #{tpu_custom_call.1} parent=1 // loop_header
      %s26 = sphi 0, %s30
      %p27 = scmp.ge.s32.totalorder %s26, 4
      %s34 = sphi 0, %s34
      %s36 = sphi 0, %s34
      %s37 = sphi 0, %s36
      %s51 = sphi 0, %s37
      %s55 = sphi 0, %s55
      %s57 = sphi 0, %s55
      %s58 = sphi 0, %s57
      %s72 = sphi 0, %s58
      %s78 = sphi 0, %s80
      %s81 = sphi 0, %s78
      %s82 = sphi 0, %s81
      %s98 = sphi 0, %s82
      %s104 = sphi 0, %s106
      %s107 = sphi 0, %s104
      %s108 = sphi 0, %s107
      %s124 = sphi 0, %s108
      %s130 = sphi 0, %s132
      %s133 = sphi 0, %s130
      %s134 = sphi 0, %s133
      %s150 = sphi 0, %s134
      %s156 = sphi 0, %s158
      %s159 = sphi 0, %s156
      %s160 = sphi 0, %s159
      %s176 = sphi 0, %s160
      %s182 = sphi 0, %s184
      %s185 = sphi 0, %s182
      %s186 = sphi 0, %s185
      %s202 = sphi 0, %s186
      %s208 = sphi 0, %s210
      %s211 = sphi 0, %s208
      %s212 = sphi 0, %s211
      %s228 = sphi 0, %s212
      %s234 = sphi 0, %s236
      %s237 = sphi 0, %s234
      %s238 = sphi 0, %s237
      %s254 = sphi 0, %s238
      %s260 = sphi 0, %s262
      %s263 = sphi 0, %s260
      %s264 = sphi 0, %s263
      %s280 = sphi 0, %s264
      %s286 = sphi 0, %s288
      %s289 = sphi 0, %s286
      %s290 = sphi 0, %s289
      %s306 = sphi 0, %s290
      %s312 = sphi 0, %s314
      %s315 = sphi 0, %s312
      %s316 = sphi 0, %s315
      %s332 = sphi 0, %s316
      %s338 = sphi 0, %s340
      %s341 = sphi 0, %s338
      %s342 = sphi 0, %s341
      %s358 = sphi 0, %s342
      %s364 = sphi 0, %s366
      %s367 = sphi 0, %s364
      %s368 = sphi 0, %s367
      %s384 = sphi 0, %s368
      %s388 = sphi 0, %s388
      %s390 = sphi 0, %s388
      %s391 = sphi 0, %s390
      %s405 = sphi 0, %s391
      %s409 = sphi 0, %s409
      %s411 = sphi 0, %s409
      %s412 = sphi 0, %s411
      %s426 = sphi 0, %s412
      %s430 = sphi 0, %s430
      %s432 = sphi 0, %s430
      %s433 = sphi 0, %s432
      %s447 = sphi 0, %s433
    $region4: #{tpu_custom_call.1} parent=1 // loop_header_branch
      %29 = sbr.rel (%p27) target = $region8
    $region5: #{tpu_custom_call.1} parent=1 // loop_body
      %s31 = ssub.s32 %s26, 1
      %s32 = ssub.s32 %s26, 2
      %s33 = sadd.s32 %s26, 1
      %s35 = sadd.s32 %s34, 1
      %p38 = scmp.eq.s32.totalorder %s26, 1
      %p39 = scmp.ne.s32.totalorder %s34, %s36
      %p40 = scmp.eq.s32.totalorder %s26, 0
      %p41 = por %p39, %p40
      %p42 = scmp.ne.s32.totalorder %s34, %s36
      %p43 = scmp.eq.s32.totalorder %s31, 1
      %p44 = por %p42, %p43
      %p45 = scmp.ne.s32.totalorder %s36, %s37
      %p46 = scmp.eq.s32.totalorder %s31, 0
      %p47 = por %p45, %p46
      %p48 = scmp.ne.s32.totalorder %s36, %s37
      %p49 = scmp.eq.s32.totalorder %s32, 1
      %p50 = por %p48, %p49
      %p52 = scmp.ne.s32.totalorder %s37, %s51
      %p53 = scmp.eq.s32.totalorder %s32, 0
      %p54 = por %p52, %p53
      %s56 = sadd.s32 %s55, 1
      %p59 = scmp.eq.s32.totalorder %s26, 1
      %p60 = scmp.ne.s32.totalorder %s55, %s57
      %p61 = scmp.eq.s32.totalorder %s26, 0
      %p62 = por %p60, %p61
      %p63 = scmp.ne.s32.totalorder %s55, %s57
      %p64 = scmp.eq.s32.totalorder %s31, 1
      %p65 = por %p63, %p64
      %p66 = scmp.ne.s32.totalorder %s57, %s58
      %p67 = scmp.eq.s32.totalorder %s31, 0
      %p68 = por %p66, %p67
      %p69 = scmp.ne.s32.totalorder %s57, %s58
      %p70 = scmp.eq.s32.totalorder %s32, 1
      %p71 = por %p69, %p70
      %p73 = scmp.ne.s32.totalorder %s58, %s72
      %p74 = scmp.eq.s32.totalorder %s32, 0
      %p75 = por %p73, %p74
      %s76 = ssub.s32 %s26, %s33
      %p77 = scmp.eq.s32.totalorder %s76, 0
      %s79 = sadd.s32 %s78, 1
      %s80 = scalar_select %p77, %s78, %s79
      %p83 = pneg %p77
      %p84 = scmp.eq.s32.totalorder %s26, 1
      %p85 = por %p83, %p84
      %p86 = scmp.ne.s32.totalorder %s78, %s81
      %p87 = scmp.eq.s32.totalorder %s26, 0
      %p88 = por %p86, %p87
      %p89 = scmp.ne.s32.totalorder %s78, %s81
      %p90 = scmp.eq.s32.totalorder %s31, 1
      %p91 = por %p89, %p90
      %p92 = scmp.ne.s32.totalorder %s81, %s82
      %p93 = scmp.eq.s32.totalorder %s31, 0
      %p94 = por %p92, %p93
      %p95 = scmp.ne.s32.totalorder %s81, %s82
      %p96 = scmp.eq.s32.totalorder %s32, 1
      %p97 = por %p95, %p96
      %p99 = scmp.ne.s32.totalorder %s82, %s98
      %p100 = scmp.eq.s32.totalorder %s32, 0
      %p101 = por %p99, %p100
      %s102 = ssub.s32 %s26, %s33
      %p103 = scmp.eq.s32.totalorder %s102, 0
      %s105 = sadd.s32 %s104, 1
      %s106 = scalar_select %p103, %s104, %s105
      %p109 = pneg %p103
      %p110 = scmp.eq.s32.totalorder %s26, 1
      %p111 = por %p109, %p110
      %p112 = scmp.ne.s32.totalorder %s104, %s107
      %p113 = scmp.eq.s32.totalorder %s26, 0
      %p114 = por %p112, %p113
      %p115 = scmp.ne.s32.totalorder %s104, %s107
      %p116 = scmp.eq.s32.totalorder %s31, 1
      %p117 = por %p115, %p116
      %p118 = scmp.ne.s32.totalorder %s107, %s108
      %p119 = scmp.eq.s32.totalorder %s31, 0
      %p120 = por %p118, %p119
      %p121 = scmp.ne.s32.totalorder %s107, %s108
      %p122 = scmp.eq.s32.totalorder %s32, 1
      %p123 = por %p121, %p122
      %p125 = scmp.ne.s32.totalorder %s108, %s124
      %p126 = scmp.eq.s32.totalorder %s32, 0
      %p127 = por %p125, %p126
      %s128 = ssub.s32 %s26, %s33
      %p129 = scmp.eq.s32.totalorder %s128, 0
      %s131 = sadd.s32 %s130, 1
      %s132 = scalar_select %p129, %s130, %s131
      %p135 = pneg %p129
      %p136 = scmp.eq.s32.totalorder %s26, 1
      %p137 = por %p135, %p136
      %p138 = scmp.ne.s32.totalorder %s130, %s133
      %p139 = scmp.eq.s32.totalorder %s26, 0
      %p140 = por %p138, %p139
      %p141 = scmp.ne.s32.totalorder %s130, %s133
      %p142 = scmp.eq.s32.totalorder %s31, 1
      %p143 = por %p141, %p142
      %p144 = scmp.ne.s32.totalorder %s133, %s134
      %p145 = scmp.eq.s32.totalorder %s31, 0
      %p146 = por %p144, %p145
      %p147 = scmp.ne.s32.totalorder %s133, %s134
      %p148 = scmp.eq.s32.totalorder %s32, 1
      %p149 = por %p147, %p148
      %p151 = scmp.ne.s32.totalorder %s134, %s150
      %p152 = scmp.eq.s32.totalorder %s32, 0
      %p153 = por %p151, %p152
      %s154 = ssub.s32 %s26, %s33
      %p155 = scmp.eq.s32.totalorder %s154, 0
      %s157 = sadd.s32 %s156, 1
      %s158 = scalar_select %p155, %s156, %s157
      %p161 = pneg %p155
      %p162 = scmp.eq.s32.totalorder %s26, 1
      %p163 = por %p161, %p162
      %p164 = scmp.ne.s32.totalorder %s156, %s159
      %p165 = scmp.eq.s32.totalorder %s26, 0
      %p166 = por %p164, %p165
      %p167 = scmp.ne.s32.totalorder %s156, %s159
      %p168 = scmp.eq.s32.totalorder %s31, 1
      %p169 = por %p167, %p168
      %p170 = scmp.ne.s32.totalorder %s159, %s160
      %p171 = scmp.eq.s32.totalorder %s31, 0
      %p172 = por %p170, %p171
      %p173 = scmp.ne.s32.totalorder %s159, %s160
      %p174 = scmp.eq.s32.totalorder %s32, 1
      %p175 = por %p173, %p174
      %p177 = scmp.ne.s32.totalorder %s160, %s176
      %p178 = scmp.eq.s32.totalorder %s32, 0
      %p179 = por %p177, %p178
      %s180 = ssub.s32 %s26, %s33
      %p181 = scmp.eq.s32.totalorder %s180, 0
      %s183 = sadd.s32 %s182, 1
      %s184 = scalar_select %p181, %s182, %s183
      %p187 = pneg %p181
      %p188 = scmp.eq.s32.totalorder %s26, 1
      %p189 = por %p187, %p188
      %p190 = scmp.ne.s32.totalorder %s182, %s185
      %p191 = scmp.eq.s32.totalorder %s26, 0
      %p192 = por %p190, %p191
      %p193 = scmp.ne.s32.totalorder %s182, %s185
      %p194 = scmp.eq.s32.totalorder %s31, 1
      %p195 = por %p193, %p194
      %p196 = scmp.ne.s32.totalorder %s185, %s186
      %p197 = scmp.eq.s32.totalorder %s31, 0
      %p198 = por %p196, %p197
      %p199 = scmp.ne.s32.totalorder %s185, %s186
      %p200 = scmp.eq.s32.totalorder %s32, 1
      %p201 = por %p199, %p200
      %p203 = scmp.ne.s32.totalorder %s186, %s202
      %p204 = scmp.eq.s32.totalorder %s32, 0
      %p205 = por %p203, %p204
      %s206 = ssub.s32 %s26, %s33
      %p207 = scmp.eq.s32.totalorder %s206, 0
      %s209 = sadd.s32 %s208, 1
      %s210 = scalar_select %p207, %s208, %s209
      %p213 = pneg %p207
      %p214 = scmp.eq.s32.totalorder %s26, 1
      %p215 = por %p213, %p214
      %p216 = scmp.ne.s32.totalorder %s208, %s211
      %p217 = scmp.eq.s32.totalorder %s26, 0
      %p218 = por %p216, %p217
      %p219 = scmp.ne.s32.totalorder %s208, %s211
      %p220 = scmp.eq.s32.totalorder %s31, 1
      %p221 = por %p219, %p220
      %p222 = scmp.ne.s32.totalorder %s211, %s212
      %p223 = scmp.eq.s32.totalorder %s31, 0
      %p224 = por %p222, %p223
      %p225 = scmp.ne.s32.totalorder %s211, %s212
      %p226 = scmp.eq.s32.totalorder %s32, 1
      %p227 = por %p225, %p226
      %p229 = scmp.ne.s32.totalorder %s212, %s228
      %p230 = scmp.eq.s32.totalorder %s32, 0
      %p231 = por %p229, %p230
      %s232 = ssub.s32 %s26, %s33
      %p233 = scmp.eq.s32.totalorder %s232, 0
      %s235 = sadd.s32 %s234, 1
      %s236 = scalar_select %p233, %s234, %s235
      %p239 = pneg %p233
      %p240 = scmp.eq.s32.totalorder %s26, 1
      %p241 = por %p239, %p240
      %p242 = scmp.ne.s32.totalorder %s234, %s237
      %p243 = scmp.eq.s32.totalorder %s26, 0
      %p244 = por %p242, %p243
      %p245 = scmp.ne.s32.totalorder %s234, %s237
      %p246 = scmp.eq.s32.totalorder %s31, 1
      %p247 = por %p245, %p246
      %p248 = scmp.ne.s32.totalorder %s237, %s238
      %p249 = scmp.eq.s32.totalorder %s31, 0
      %p250 = por %p248, %p249
      %p251 = scmp.ne.s32.totalorder %s237, %s238
      %p252 = scmp.eq.s32.totalorder %s32, 1
      %p253 = por %p251, %p252
      %p255 = scmp.ne.s32.totalorder %s238, %s254
      %p256 = scmp.eq.s32.totalorder %s32, 0
      %p257 = por %p255, %p256
      %s258 = ssub.s32 %s26, %s33
      %p259 = scmp.eq.s32.totalorder %s258, 0
      %s261 = sadd.s32 %s260, 1
      %s262 = scalar_select %p259, %s260, %s261
      %p265 = pneg %p259
      %p266 = scmp.eq.s32.totalorder %s26, 1
      %p267 = por %p265, %p266
      %p268 = scmp.ne.s32.totalorder %s260, %s263
      %p269 = scmp.eq.s32.totalorder %s26, 0
      %p270 = por %p268, %p269
      %p271 = scmp.ne.s32.totalorder %s260, %s263
      %p272 = scmp.eq.s32.totalorder %s31, 1
      %p273 = por %p271, %p272
      %p274 = scmp.ne.s32.totalorder %s263, %s264
      %p275 = scmp.eq.s32.totalorder %s31, 0
      %p276 = por %p274, %p275
      %p277 = scmp.ne.s32.totalorder %s263, %s264
      %p278 = scmp.eq.s32.totalorder %s32, 1
      %p279 = por %p277, %p278
      %p281 = scmp.ne.s32.totalorder %s264, %s280
      %p282 = scmp.eq.s32.totalorder %s32, 0
      %p283 = por %p281, %p282
      %s284 = ssub.s32 %s26, %s33
      %p285 = scmp.eq.s32.totalorder %s284, 0
      %s287 = sadd.s32 %s286, 1
      %s288 = scalar_select %p285, %s286, %s287
      %p291 = pneg %p285
      %p292 = scmp.eq.s32.totalorder %s26, 1
      %p293 = por %p291, %p292
      %p294 = scmp.ne.s32.totalorder %s286, %s289
      %p295 = scmp.eq.s32.totalorder %s26, 0
      %p296 = por %p294, %p295
      %p297 = scmp.ne.s32.totalorder %s286, %s289
      %p298 = scmp.eq.s32.totalorder %s31, 1
      %p299 = por %p297, %p298
      %p300 = scmp.ne.s32.totalorder %s289, %s290
      %p301 = scmp.eq.s32.totalorder %s31, 0
      %p302 = por %p300, %p301
      %p303 = scmp.ne.s32.totalorder %s289, %s290
      %p304 = scmp.eq.s32.totalorder %s32, 1
      %p305 = por %p303, %p304
      %p307 = scmp.ne.s32.totalorder %s290, %s306
      %p308 = scmp.eq.s32.totalorder %s32, 0
      %p309 = por %p307, %p308
      %s310 = ssub.s32 %s26, %s33
      %p311 = scmp.eq.s32.totalorder %s310, 0
      %s313 = sadd.s32 %s312, 1
      %s314 = scalar_select %p311, %s312, %s313
      %p317 = pneg %p311
      %p318 = scmp.eq.s32.totalorder %s26, 1
      %p319 = por %p317, %p318
      %p320 = scmp.ne.s32.totalorder %s312, %s315
      %p321 = scmp.eq.s32.totalorder %s26, 0
      %p322 = por %p320, %p321
      %p323 = scmp.ne.s32.totalorder %s312, %s315
      %p324 = scmp.eq.s32.totalorder %s31, 1
      %p325 = por %p323, %p324
      %p326 = scmp.ne.s32.totalorder %s315, %s316
      %p327 = scmp.eq.s32.totalorder %s31, 0
      %p328 = por %p326, %p327
      %p329 = scmp.ne.s32.totalorder %s315, %s316
      %p330 = scmp.eq.s32.totalorder %s32, 1
      %p331 = por %p329, %p330
      %p333 = scmp.ne.s32.totalorder %s316, %s332
      %p334 = scmp.eq.s32.totalorder %s32, 0
      %p335 = por %p333, %p334
      %s336 = ssub.s32 %s26, %s33
      %p337 = scmp.eq.s32.totalorder %s336, 0
      %s339 = sadd.s32 %s338, 1
      %s340 = scalar_select %p337, %s338, %s339
      %p343 = pneg %p337
      %p344 = scmp.eq.s32.totalorder %s26, 1
      %p345 = por %p343, %p344
      %p346 = scmp.ne.s32.totalorder %s338, %s341
      %p347 = scmp.eq.s32.totalorder %s26, 0
      %p348 = por %p346, %p347
      %p349 = scmp.ne.s32.totalorder %s338, %s341
      %p350 = scmp.eq.s32.totalorder %s31, 1
      %p351 = por %p349, %p350
      %p352 = scmp.ne.s32.totalorder %s341, %s342
      %p353 = scmp.eq.s32.totalorder %s31, 0
      %p354 = por %p352, %p353
      %p355 = scmp.ne.s32.totalorder %s341, %s342
      %p356 = scmp.eq.s32.totalorder %s32, 1
      %p357 = por %p355, %p356
      %p359 = scmp.ne.s32.totalorder %s342, %s358
      %p360 = scmp.eq.s32.totalorder %s32, 0
      %p361 = por %p359, %p360
      %s362 = ssub.s32 %s26, %s33
      %p363 = scmp.eq.s32.totalorder %s362, 0
      %s365 = sadd.s32 %s364, 1
      %s366 = scalar_select %p363, %s364, %s365
      %p369 = pneg %p363
      %p370 = scmp.eq.s32.totalorder %s26, 1
      %p371 = por %p369, %p370
      %p372 = scmp.ne.s32.totalorder %s364, %s367
      %p373 = scmp.eq.s32.totalorder %s26, 0
      %p374 = por %p372, %p373
      %p375 = scmp.ne.s32.totalorder %s364, %s367
      %p376 = scmp.eq.s32.totalorder %s31, 1
      %p377 = por %p375, %p376
      %p378 = scmp.ne.s32.totalorder %s367, %s368
      %p379 = scmp.eq.s32.totalorder %s31, 0
      %p380 = por %p378, %p379
      %p381 = scmp.ne.s32.totalorder %s367, %s368
      %p382 = scmp.eq.s32.totalorder %s32, 1
      %p383 = por %p381, %p382
      %p385 = scmp.ne.s32.totalorder %s368, %s384
      %p386 = scmp.eq.s32.totalorder %s32, 0
      %p387 = por %p385, %p386
      %s389 = sadd.s32 %s388, 1
      %p392 = scmp.eq.s32.totalorder %s26, 1
      %p393 = scmp.ne.s32.totalorder %s388, %s390
      %p394 = scmp.eq.s32.totalorder %s26, 0
      %p395 = por %p393, %p394
      %p396 = scmp.ne.s32.totalorder %s388, %s390
      %p397 = scmp.eq.s32.totalorder %s31, 1
      %p398 = por %p396, %p397
      %p399 = scmp.ne.s32.totalorder %s390, %s391
      %p400 = scmp.eq.s32.totalorder %s31, 0
      %p401 = por %p399, %p400
      %p402 = scmp.ne.s32.totalorder %s390, %s391
      %p403 = scmp.eq.s32.totalorder %s32, 1
      %p404 = por %p402, %p403
      %p406 = scmp.ne.s32.totalorder %s391, %s405
      %p407 = scmp.eq.s32.totalorder %s32, 0
      %p408 = por %p406, %p407
      %s410 = sadd.s32 %s409, 1
      %p413 = scmp.eq.s32.totalorder %s26, 1
      %p414 = scmp.ne.s32.totalorder %s409, %s411
      %p415 = scmp.eq.s32.totalorder %s26, 0
      %p416 = por %p414, %p415
      %p417 = scmp.ne.s32.totalorder %s409, %s411
      %p418 = scmp.eq.s32.totalorder %s31, 1
      %p419 = por %p417, %p418
      %p420 = scmp.ne.s32.totalorder %s411, %s412
      %p421 = scmp.eq.s32.totalorder %s31, 0
      %p422 = por %p420, %p421
      %p423 = scmp.ne.s32.totalorder %s411, %s412
      %p424 = scmp.eq.s32.totalorder %s32, 1
      %p425 = por %p423, %p424
      %p427 = scmp.ne.s32.totalorder %s412, %s426
      %p428 = scmp.eq.s32.totalorder %s32, 0
      %p429 = por %p427, %p428
      %s431 = sadd.s32 %s430, 1
      %p434 = scmp.eq.s32.totalorder %s26, 1
      %p435 = scmp.ne.s32.totalorder %s430, %s432
      %p436 = scmp.eq.s32.totalorder %s26, 0
      %p437 = por %p435, %p436
      %p438 = scmp.ne.s32.totalorder %s430, %s432
      %p439 = scmp.eq.s32.totalorder %s31, 1
      %p440 = por %p438, %p439
      %p441 = scmp.ne.s32.totalorder %s432, %s433
      %p442 = scmp.eq.s32.totalorder %s31, 0
      %p443 = por %p441, %p442
      %p444 = scmp.ne.s32.totalorder %s432, %s433
      %p445 = scmp.eq.s32.totalorder %s32, 1
      %p446 = por %p444, %p445
      %p448 = scmp.ne.s32.totalorder %s433, %s447
      %p449 = scmp.eq.s32.totalorder %s32, 0
      %p450 = por %p448, %p449
      %p451 = scmp.le.s32.totalorder 1, %s26
      %p452 = scmp.lt.s32.totalorder %s26, 3
      %p453 = pnand %p451, %p452
      %p454 = pneg %p453
      // Predicated region
      $region9: #{tpu_custom_call.1} parent=5 // pred_check
        _
      $region10: #{tpu_custom_call.1} parent=5 // pred_check_branch
        %456 = sbr.rel (%p453) target = $region12
      $region11: #{tpu_custom_call.1} parent=5 // pred_region
        %s457 = ssub.s32 %s26, 1
        // Predicated region
        $region13: #{tpu_custom_call.1} parent=11 // pred_check
          %p458 = pneg %p47
        $region14: #{tpu_custom_call.1} parent=11 // pred_check_branch
          %460 = sbr.rel (%p458) target = $region16
        $region15: #{tpu_custom_call.1} parent=11 // pred_region
          %s462 = ssub.s32 256, 256
          %463 = vsyncadd [#allocation4], %s462
          %s464 = sshll.u32 [#allocation3], 4
          %s465 = int_to_ptr.vmem [resolvable:$true] %s464
          %470 = dma.hbm_to_vmem [thread:$0]  %s0, 256, %s465, [#allocation4], 128, 128, 8
        $region16: #{tpu_custom_call.1} parent=11 // pred_fallthru
          _
        // Predicated region
        $region17: #{tpu_custom_call.1} parent=11 // pred_check
          %p471 = pneg %p68
        $region18: #{tpu_custom_call.1} parent=11 // pred_check_branch
          %473 = sbr.rel (%p471) target = $region20
        $region19: #{tpu_custom_call.1} parent=11 // pred_region
          %s475 = ssub.s32 128, 128
          %476 = vsyncadd [#allocation7], %s475
          %s478 = sshll.u32 [#allocation6], 4
          %s479 = int_to_ptr.vmem [resolvable:$true] %s478
          %481 = dma.hbm_to_vmem [thread:$0]  %s1, 128, %s479, [#allocation7]
        $region20: #{tpu_custom_call.1} parent=11 // pred_fallthru
          _
        // Predicated region
        $region21: #{tpu_custom_call.1} parent=11 // pred_check
          %p482 = pneg %p401
        $region22: #{tpu_custom_call.1} parent=11 // pred_check_branch
          %484 = sbr.rel (%p482) target = $region24
        $region23: #{tpu_custom_call.1} parent=11 // pred_region
          %s486 = ssub.s32 16, 16
          %487 = vsyncadd [#allocation7], %s486
          %s489 = sshll.u32 [#allocation20], 4
          %s490 = int_to_ptr.vmem [resolvable:$true] %s489
          %492 = dma.hbm_to_vmem [thread:$0]  %s14, 16, %s490, [#allocation7]
        $region24: #{tpu_custom_call.1} parent=11 // pred_fallthru
          _
        // Predicated region
        $region25: #{tpu_custom_call.1} parent=11 // pred_check
          %p493 = pneg %p422
        $region26: #{tpu_custom_call.1} parent=11 // pred_check_branch
          %495 = sbr.rel (%p493) target = $region28
        $region27: #{tpu_custom_call.1} parent=11 // pred_region
          %s497 = ssub.s32 16, 16
          %498 = vsyncadd [#allocation22], %s497
          %s500 = sshll.u32 [#allocation21], 4
          %s501 = int_to_ptr.vmem [resolvable:$true] %s500
          %503 = dma.hbm_to_vmem [thread:$0]  %s15, 16, %s501, [#allocation22]
        $region28: #{tpu_custom_call.1} parent=11 // pred_fallthru
          _
      $region12: #{tpu_custom_call.1} parent=5 // pred_fallthru
        _
      %p504 = scmp.lt.s32.totalorder %s26, 2
      // Predicated region
      $region29: #{tpu_custom_call.1} parent=5 // pred_check
        %p505 = pneg %p504
      $region30: #{tpu_custom_call.1} parent=5 // pred_check_branch
        %507 = sbr.rel (%p505) target = $region32
      $region31: #{tpu_custom_call.1} parent=5 // pred_region
        // Predicated region
        $region33: #{tpu_custom_call.1} parent=31 // pred_check
          %p508 = pneg %p88
        $region34: #{tpu_custom_call.1} parent=31 // pred_check_branch
          %510 = sbr.rel (%p508) target = $region36
        $region35: #{tpu_custom_call.1} parent=31 // pred_region
          %s511 = sand.u32 %s26, 1
          %s512 = scalar_lea.sflag [#allocation4], %s511
          %s513 = sand.u32 %s78, 1
          %s514 = scalar_lea.vmem [#allocation8], %s513
          %s516 = ssub.s32 16, 16
          %517 = vsyncadd %s512, %s516
          %s518 = smul.addr %s26, 16
          %s519 = scalar_lea.hbm %s2, %s518
          %s521 = sshll.u32 %s514, 4
          %s522 = int_to_ptr.vmem [resolvable:$true] %s521
          %524 = dma.hbm_to_vmem [thread:$0]  %s519, 16, %s522, %s512
        $region36: #{tpu_custom_call.1} parent=31 // pred_fallthru
          _
        // Predicated region
        $region37: #{tpu_custom_call.1} parent=31 // pred_check
          %p525 = pneg %p114
        $region38: #{tpu_custom_call.1} parent=31 // pred_check_branch
          %527 = sbr.rel (%p525) target = $region40
        $region39: #{tpu_custom_call.1} parent=31 // pred_region
          %s528 = sand.u32 %s26, 1
          %s529 = scalar_lea.sflag [#allocation4], %s528
          %s530 = sand.u32 %s104, 1
          %s531 = scalar_lea.vmem [#allocation9], %s530
          %s533 = ssub.s32 16, 16
          %534 = vsyncadd %s529, %s533
          %s535 = smul.addr %s26, 16
          %s536 = scalar_lea.hbm %s3, %s535
          %s538 = sshll.u32 %s531, 4
          %s539 = int_to_ptr.vmem [resolvable:$true] %s538
          %541 = dma.hbm_to_vmem [thread:$0]  %s536, 16, %s539, %s529
        $region40: #{tpu_custom_call.1} parent=31 // pred_fallthru
          _
        // Predicated region
        $region41: #{tpu_custom_call.1} parent=31 // pred_check
          %p542 = pneg %p140
        $region42: #{tpu_custom_call.1} parent=31 // pred_check_branch
          %544 = sbr.rel (%p542) target = $region44
        $region43: #{tpu_custom_call.1} parent=31 // pred_region
          %s545 = sand.u32 %s26, 1
          %s546 = scalar_lea.sflag [#allocation4], %s545
          %s547 = sand.u32 %s130, 1
          %s548 = smul.addr %s547, 16
          %s549 = scalar_lea.vmem [#allocation10], %s548
          %s551 = ssub.s32 256, 256
          %552 = vsyncadd %s546, %s551
          %s553 = smul.addr %s26, 4
          %s554 = smul.addr %s553, 64
          %s555 = scalar_lea.hbm %s4, %s554
          %s556 = sshll.u32 %s549, 4
          %s557 = int_to_ptr.vmem [resolvable:$true] %s556
          %562 = dma.hbm_to_vmem [thread:$0]  %s555, 256, %s557, %s546, 64, 64, 4
        $region44: #{tpu_custom_call.1} parent=31 // pred_fallthru
          _
        // Predicated region
        $region45: #{tpu_custom_call.1} parent=31 // pred_check
          %p563 = pneg %p166
        $region46: #{tpu_custom_call.1} parent=31 // pred_check_branch
          %565 = sbr.rel (%p563) target = $region48
        $region47: #{tpu_custom_call.1} parent=31 // pred_region
          %s566 = sand.u32 %s26, 1
          %s567 = scalar_lea.sflag [#allocation4], %s566
          %s568 = sand.u32 %s156, 1
          %s569 = scalar_lea.vmem [#allocation11], %s568
          %s571 = ssub.s32 16, 16
          %572 = vsyncadd %s567, %s571
          %s573 = smul.addr %s26, 16
          %s574 = scalar_lea.hbm %s5, %s573
          %s576 = sshll.u32 %s569, 4
          %s577 = int_to_ptr.vmem [resolvable:$true] %s576
          %579 = dma.hbm_to_vmem [thread:$0]  %s574, 16, %s577, %s567
        $region48: #{tpu_custom_call.1} parent=31 // pred_fallthru
          _
        // Predicated region
        $region49: #{tpu_custom_call.1} parent=31 // pred_check
          %p580 = pneg %p192
        $region50: #{tpu_custom_call.1} parent=31 // pred_check_branch
          %582 = sbr.rel (%p580) target = $region52
        $region51: #{tpu_custom_call.1} parent=31 // pred_region
          %s583 = sand.u32 %s26, 1
          %s584 = scalar_lea.sflag [#allocation4], %s583
          %s585 = sand.u32 %s182, 1
          %s586 = smul.addr %s585, 16
          %s587 = scalar_lea.vmem [#allocation12], %s586
          %s589 = ssub.s32 256, 256
          %590 = vsyncadd %s584, %s589
          %s591 = smul.addr %s26, 4
          %s592 = smul.addr %s591, 64
          %s593 = scalar_lea.hbm %s6, %s592
          %s594 = sshll.u32 %s587, 4
          %s595 = int_to_ptr.vmem [resolvable:$true] %s594
          %600 = dma.hbm_to_vmem [thread:$0]  %s593, 256, %s595, %s584, 64, 64, 4
        $region52: #{tpu_custom_call.1} parent=31 // pred_fallthru
          _
        // Predicated region
        $region53: #{tpu_custom_call.1} parent=31 // pred_check
          %p601 = pneg %p218
        $region54: #{tpu_custom_call.1} parent=31 // pred_check_branch
          %603 = sbr.rel (%p601) target = $region56
        $region55: #{tpu_custom_call.1} parent=31 // pred_region
          %s604 = sand.u32 %s26, 1
          %s605 = scalar_lea.sflag [#allocation4], %s604
          %s606 = sand.u32 %s208, 1
          %s607 = scalar_lea.vmem [#allocation13], %s606
          %s609 = ssub.s32 16, 16
          %610 = vsyncadd %s605, %s609
          %s611 = smul.addr %s26, 16
          %s612 = scalar_lea.hbm %s7, %s611
          %s614 = sshll.u32 %s607, 4
          %s615 = int_to_ptr.vmem [resolvable:$true] %s614
          %617 = dma.hbm_to_vmem [thread:$0]  %s612, 16, %s615, %s605
        $region56: #{tpu_custom_call.1} parent=31 // pred_fallthru
          _
        // Predicated region
        $region57: #{tpu_custom_call.1} parent=31 // pred_check
          %p618 = pneg %p244
        $region58: #{tpu_custom_call.1} parent=31 // pred_check_branch
          %620 = sbr.rel (%p618) target = $region60
        $region59: #{tpu_custom_call.1} parent=31 // pred_region
          %s621 = sand.u32 %s26, 1
          %s622 = scalar_lea.sflag [#allocation4], %s621
          %s623 = sand.u32 %s234, 1
          %s624 = scalar_lea.vmem [#allocation14], %s623
          %s626 = ssub.s32 16, 16
          %627 = vsyncadd %s622, %s626
          %s628 = smul.addr %s26, 16
          %s629 = scalar_lea.hbm %s8, %s628
          %s631 = sshll.u32 %s624, 4
          %s632 = int_to_ptr.vmem [resolvable:$true] %s631
          %634 = dma.hbm_to_vmem [thread:$0]  %s629, 16, %s632, %s622
        $region60: #{tpu_custom_call.1} parent=31 // pred_fallthru
          _
        // Predicated region
        $region61: #{tpu_custom_call.1} parent=31 // pred_check
          %p635 = pneg %p270
        $region62: #{tpu_custom_call.1} parent=31 // pred_check_branch
          %637 = sbr.rel (%p635) target = $region64
        $region63: #{tpu_custom_call.1} parent=31 // pred_region
          %s638 = sand.u32 %s26, 1
          %s639 = scalar_lea.sflag [#allocation4], %s638
          %s640 = sand.u32 %s260, 1
          %s641 = scalar_lea.vmem [#allocation15], %s640
          %s643 = ssub.s32 16, 16
          %644 = vsyncadd %s639, %s643
          %s645 = smul.addr %s26, 16
          %s646 = scalar_lea.hbm %s9, %s645
          %s648 = sshll.u32 %s641, 4
          %s649 = int_to_ptr.vmem [resolvable:$true] %s648
          %651 = dma.hbm_to_vmem [thread:$0]  %s646, 16, %s649, %s639
        $region64: #{tpu_custom_call.1} parent=31 // pred_fallthru
          _
        // Predicated region
        $region65: #{tpu_custom_call.1} parent=31 // pred_check
          %p652 = pneg %p296
        $region66: #{tpu_custom_call.1} parent=31 // pred_check_branch
          %654 = sbr.rel (%p652) target = $region68
        $region67: #{tpu_custom_call.1} parent=31 // pred_region
          %s655 = sand.u32 %s26, 1
          %s656 = scalar_lea.sflag [#allocation4], %s655
          %s657 = sand.u32 %s286, 1
          %s658 = smul.addr %s657, 16
          %s659 = scalar_lea.vmem [#allocation16], %s658
          %s661 = ssub.s32 256, 256
          %662 = vsyncadd %s656, %s661
          %s663 = smul.addr %s26, 4
          %s664 = smul.addr %s663, 64
          %s665 = scalar_lea.hbm %s10, %s664
          %s666 = sshll.u32 %s659, 4
          %s667 = int_to_ptr.vmem [resolvable:$true] %s666
          %672 = dma.hbm_to_vmem [thread:$0]  %s665, 256, %s667, %s656, 64, 64, 4
        $region68: #{tpu_custom_call.1} parent=31 // pred_fallthru
          _
        // Predicated region
        $region69: #{tpu_custom_call.1} parent=31 // pred_check
          %p673 = pneg %p322
        $region70: #{tpu_custom_call.1} parent=31 // pred_check_branch
          %675 = sbr.rel (%p673) target = $region72
        $region71: #{tpu_custom_call.1} parent=31 // pred_region
          %s676 = sand.u32 %s26, 1
          %s677 = scalar_lea.sflag [#allocation4], %s676
          %s678 = sand.u32 %s312, 1
          %s679 = scalar_lea.vmem [#allocation17], %s678
          %s681 = ssub.s32 16, 16
          %682 = vsyncadd %s677, %s681
          %s683 = smul.addr %s26, 16
          %s684 = scalar_lea.hbm %s11, %s683
          %s686 = sshll.u32 %s679, 4
          %s687 = int_to_ptr.vmem [resolvable:$true] %s686
          %689 = dma.hbm_to_vmem [thread:$0]  %s684, 16, %s687, %s677
        $region72: #{tpu_custom_call.1} parent=31 // pred_fallthru
          _
        // Predicated region
        $region73: #{tpu_custom_call.1} parent=31 // pred_check
          %p690 = pneg %p348
        $region74: #{tpu_custom_call.1} parent=31 // pred_check_branch
          %692 = sbr.rel (%p690) target = $region76
        $region75: #{tpu_custom_call.1} parent=31 // pred_region
          %s693 = sand.u32 %s26, 1
          %s694 = scalar_lea.sflag [#allocation4], %s693
          %s695 = sand.u32 %s338, 1
          %s696 = smul.addr %s695, 64
          %s697 = scalar_lea.vmem [#allocation18], %s696
          %s699 = ssub.s32 1024, 1024
          %700 = vsyncadd %s694, %s699
          %s701 = smul.addr %s26, 16
          %s702 = smul.addr %s701, 64
          %s703 = scalar_lea.hbm %s12, %s702
          %s704 = sshll.u32 %s697, 4
          %s705 = int_to_ptr.vmem [resolvable:$true] %s704
          %710 = dma.hbm_to_vmem [thread:$0]  %s703, 1024, %s705, %s694, 64, 64, 4
        $region76: #{tpu_custom_call.1} parent=31 // pred_fallthru
          _
        // Predicated region
        $region77: #{tpu_custom_call.1} parent=31 // pred_check
          %p711 = pneg %p374
        $region78: #{tpu_custom_call.1} parent=31 // pred_check_branch
          %713 = sbr.rel (%p711) target = $region80
        $region79: #{tpu_custom_call.1} parent=31 // pred_region
          %s714 = sand.u32 %s26, 1
          %s715 = scalar_lea.sflag [#allocation4], %s714
          %s716 = sand.u32 %s364, 1
          %s717 = scalar_lea.vmem [#allocation19], %s716
          %s719 = ssub.s32 16, 16
          %720 = vsyncadd %s715, %s719
          %s721 = smul.addr %s26, 16
          %s722 = scalar_lea.hbm %s13, %s721
          %s724 = sshll.u32 %s717, 4
          %s725 = int_to_ptr.vmem [resolvable:$true] %s724
          %727 = dma.hbm_to_vmem [thread:$0]  %s722, 16, %s725, %s715
        $region80: #{tpu_custom_call.1} parent=31 // pred_fallthru
          _
      $region32: #{tpu_custom_call.1} parent=5 // pred_fallthru
        _
      %p728 = scmp.le.s32.totalorder 1, %s26
      %p729 = scmp.lt.s32.totalorder %s26, 3
      %p730 = pnand %p728, %p729
      %p731 = pneg %p730
      // Predicated region
      $region81: #{tpu_custom_call.1} parent=5 // pred_check
        _
      $region82: #{tpu_custom_call.1} parent=5 // pred_check_branch
        %733 = sbr.rel (%p730) target = $region84
      $region83: #{tpu_custom_call.1} parent=5 // pred_region
        %s734 = ssub.s32 %s26, 1
        // Predicated region
        $region85: #{tpu_custom_call.1} parent=83 // pred_check
          %p735 = pneg %p47
        $region86: #{tpu_custom_call.1} parent=83 // pred_check_branch
          %737 = sbr.rel (%p735) target = $region88
        $region87: #{tpu_custom_call.1} parent=83 // pred_region
          %738 = dma.done [#allocation4], 256
        $region88: #{tpu_custom_call.1} parent=83 // pred_fallthru
          _
        // Predicated region
        $region89: #{tpu_custom_call.1} parent=83 // pred_check
          %p739 = pneg %p68
        $region90: #{tpu_custom_call.1} parent=83 // pred_check_branch
          %741 = sbr.rel (%p739) target = $region92
        $region91: #{tpu_custom_call.1} parent=83 // pred_region
          %742 = dma.done [#allocation7], 128
        $region92: #{tpu_custom_call.1} parent=83 // pred_fallthru
          _
        %s743 = sand.u32 %s31, 1
        %s744 = scalar_lea.sflag [#allocation4], %s743
        %s745 = sand.u32 %s81, 1
        %s746 = scalar_lea.vmem [#allocation8], %s745
        // Predicated region
        $region93: #{tpu_custom_call.1} parent=83 // pred_check
          %p747 = pneg %p94
        $region94: #{tpu_custom_call.1} parent=83 // pred_check_branch
          %749 = sbr.rel (%p747) target = $region96
        $region95: #{tpu_custom_call.1} parent=83 // pred_region
          %750 = dma.done %s744, 16
        $region96: #{tpu_custom_call.1} parent=83 // pred_fallthru
          _
        %s751 = sand.u32 %s31, 1
        %s752 = scalar_lea.sflag [#allocation4], %s751
        %s753 = sand.u32 %s107, 1
        %s754 = scalar_lea.vmem [#allocation9], %s753
        // Predicated region
        $region97: #{tpu_custom_call.1} parent=83 // pred_check
          %p755 = pneg %p120
        $region98: #{tpu_custom_call.1} parent=83 // pred_check_branch
          %757 = sbr.rel (%p755) target = $region100
        $region99: #{tpu_custom_call.1} parent=83 // pred_region
          %758 = dma.done %s752, 16
        $region100: #{tpu_custom_call.1} parent=83 // pred_fallthru
          _
        %s759 = sand.u32 %s31, 1
        %s760 = scalar_lea.sflag [#allocation4], %s759
        %s761 = sand.u32 %s133, 1
        %s762 = smul.addr %s761, 16
        %s763 = scalar_lea.vmem [#allocation10], %s762
        // Predicated region
        $region101: #{tpu_custom_call.1} parent=83 // pred_check
          %p764 = pneg %p146
        $region102: #{tpu_custom_call.1} parent=83 // pred_check_branch
          %766 = sbr.rel (%p764) target = $region104
        $region103: #{tpu_custom_call.1} parent=83 // pred_region
          %767 = dma.done %s760, 256
        $region104: #{tpu_custom_call.1} parent=83 // pred_fallthru
          _
        %s768 = sand.u32 %s31, 1
        %s769 = scalar_lea.sflag [#allocation4], %s768
        %s770 = sand.u32 %s159, 1
        %s771 = scalar_lea.vmem [#allocation11], %s770
        // Predicated region
        $region105: #{tpu_custom_call.1} parent=83 // pred_check
          %p772 = pneg %p172
        $region106: #{tpu_custom_call.1} parent=83 // pred_check_branch
          %774 = sbr.rel (%p772) target = $region108
        $region107: #{tpu_custom_call.1} parent=83 // pred_region
          %775 = dma.done %s769, 16
        $region108: #{tpu_custom_call.1} parent=83 // pred_fallthru
          _
        %s776 = sand.u32 %s31, 1
        %s777 = scalar_lea.sflag [#allocation4], %s776
        %s778 = sand.u32 %s185, 1
        %s779 = smul.addr %s778, 16
        %s780 = scalar_lea.vmem [#allocation12], %s779
        // Predicated region
        $region109: #{tpu_custom_call.1} parent=83 // pred_check
          %p781 = pneg %p198
        $region110: #{tpu_custom_call.1} parent=83 // pred_check_branch
          %783 = sbr.rel (%p781) target = $region112
        $region111: #{tpu_custom_call.1} parent=83 // pred_region
          %784 = dma.done %s777, 256
        $region112: #{tpu_custom_call.1} parent=83 // pred_fallthru
          _
        %s785 = sand.u32 %s31, 1
        %s786 = scalar_lea.sflag [#allocation4], %s785
        %s787 = sand.u32 %s211, 1
        %s788 = scalar_lea.vmem [#allocation13], %s787
        // Predicated region
        $region113: #{tpu_custom_call.1} parent=83 // pred_check
          %p789 = pneg %p224
        $region114: #{tpu_custom_call.1} parent=83 // pred_check_branch
          %791 = sbr.rel (%p789) target = $region116
        $region115: #{tpu_custom_call.1} parent=83 // pred_region
          %792 = dma.done %s786, 16
        $region116: #{tpu_custom_call.1} parent=83 // pred_fallthru
          _
        %s793 = sand.u32 %s31, 1
        %s794 = scalar_lea.sflag [#allocation4], %s793
        %s795 = sand.u32 %s237, 1
        %s796 = scalar_lea.vmem [#allocation14], %s795
        // Predicated region
        $region117: #{tpu_custom_call.1} parent=83 // pred_check
          %p797 = pneg %p250
        $region118: #{tpu_custom_call.1} parent=83 // pred_check_branch
          %799 = sbr.rel (%p797) target = $region120
        $region119: #{tpu_custom_call.1} parent=83 // pred_region
          %800 = dma.done %s794, 16
        $region120: #{tpu_custom_call.1} parent=83 // pred_fallthru
          _
        %s801 = sand.u32 %s31, 1
        %s802 = scalar_lea.sflag [#allocation4], %s801
        %s803 = sand.u32 %s263, 1
        %s804 = scalar_lea.vmem [#allocation15], %s803
        // Predicated region
        $region121: #{tpu_custom_call.1} parent=83 // pred_check
          %p805 = pneg %p276
        $region122: #{tpu_custom_call.1} parent=83 // pred_check_branch
          %807 = sbr.rel (%p805) target = $region124
        $region123: #{tpu_custom_call.1} parent=83 // pred_region
          %808 = dma.done %s802, 16
        $region124: #{tpu_custom_call.1} parent=83 // pred_fallthru
          _
        %s809 = sand.u32 %s31, 1
        %s810 = scalar_lea.sflag [#allocation4], %s809
        %s811 = sand.u32 %s289, 1
        %s812 = smul.addr %s811, 16
        %s813 = scalar_lea.vmem [#allocation16], %s812
        // Predicated region
        $region125: #{tpu_custom_call.1} parent=83 // pred_check
          %p814 = pneg %p302
        $region126: #{tpu_custom_call.1} parent=83 // pred_check_branch
          %816 = sbr.rel (%p814) target = $region128
        $region127: #{tpu_custom_call.1} parent=83 // pred_region
          %817 = dma.done %s810, 256
        $region128: #{tpu_custom_call.1} parent=83 // pred_fallthru
          _
        %s818 = sand.u32 %s31, 1
        %s819 = scalar_lea.sflag [#allocation4], %s818
        %s820 = sand.u32 %s315, 1
        %s821 = scalar_lea.vmem [#allocation17], %s820
        // Predicated region
        $region129: #{tpu_custom_call.1} parent=83 // pred_check
          %p822 = pneg %p328
        $region130: #{tpu_custom_call.1} parent=83 // pred_check_branch
          %824 = sbr.rel (%p822) target = $region132
        $region131: #{tpu_custom_call.1} parent=83 // pred_region
          %825 = dma.done %s819, 16
        $region132: #{tpu_custom_call.1} parent=83 // pred_fallthru
          _
        %s826 = sand.u32 %s31, 1
        %s827 = scalar_lea.sflag [#allocation4], %s826
        %s828 = sand.u32 %s341, 1
        %s829 = smul.addr %s828, 64
        %s830 = scalar_lea.vmem [#allocation18], %s829
        // Predicated region
        $region133: #{tpu_custom_call.1} parent=83 // pred_check
          %p831 = pneg %p354
        $region134: #{tpu_custom_call.1} parent=83 // pred_check_branch
          %833 = sbr.rel (%p831) target = $region136
        $region135: #{tpu_custom_call.1} parent=83 // pred_region
          %834 = dma.done %s827, 1024
        $region136: #{tpu_custom_call.1} parent=83 // pred_fallthru
          _
        %s835 = sand.u32 %s31, 1
        %s836 = scalar_lea.sflag [#allocation4], %s835
        %s837 = sand.u32 %s367, 1
        %s838 = scalar_lea.vmem [#allocation19], %s837
        // Predicated region
        $region137: #{tpu_custom_call.1} parent=83 // pred_check
          %p839 = pneg %p380
        $region138: #{tpu_custom_call.1} parent=83 // pred_check_branch
          %841 = sbr.rel (%p839) target = $region140
        $region139: #{tpu_custom_call.1} parent=83 // pred_region
          %842 = dma.done %s836, 16
        $region140: #{tpu_custom_call.1} parent=83 // pred_fallthru
          _
        // Predicated region
        $region141: #{tpu_custom_call.1} parent=83 // pred_check
          %p843 = pneg %p401
        $region142: #{tpu_custom_call.1} parent=83 // pred_check_branch
          %845 = sbr.rel (%p843) target = $region144
        $region143: #{tpu_custom_call.1} parent=83 // pred_region
          %846 = dma.done [#allocation7], 16
        $region144: #{tpu_custom_call.1} parent=83 // pred_fallthru
          _
        // Predicated region
        $region145: #{tpu_custom_call.1} parent=83 // pred_check
          %p847 = pneg %p422
        $region146: #{tpu_custom_call.1} parent=83 // pred_check_branch
          %849 = sbr.rel (%p847) target = $region148
        $region147: #{tpu_custom_call.1} parent=83 // pred_region
          %850 = dma.done [#allocation22], 16
        $region148: #{tpu_custom_call.1} parent=83 // pred_fallthru
          _
        %p851 = pneg %p47
        %p852 = pneg %p44
        %p853 = pneg %p68
        %p854 = pneg %p65
        %s855 = sand.u32 %s31, 1
        %s856 = scalar_lea.sflag [#allocation4], %s855
        %s857 = sand.u32 %s81, 1
        %s858 = scalar_lea.vmem [#allocation8], %s857
        %p859 = pneg %p94
        %p860 = pneg %p91
        %s861 = sand.u32 %s31, 1
        %s862 = scalar_lea.sflag [#allocation4], %s861
        %s863 = sand.u32 %s107, 1
        %s864 = scalar_lea.vmem [#allocation9], %s863
        %p865 = pneg %p120
        %p866 = pneg %p117
        %s867 = sand.u32 %s31, 1
        %s868 = scalar_lea.sflag [#allocation4], %s867
        %s869 = sand.u32 %s133, 1
        %s870 = smul.addr %s869, 16
        %s871 = scalar_lea.vmem [#allocation10], %s870
        %p872 = pneg %p146
        %p873 = pneg %p143
        %s874 = sand.u32 %s31, 1
        %s875 = scalar_lea.sflag [#allocation4], %s874
        %s876 = sand.u32 %s159, 1
        %s877 = scalar_lea.vmem [#allocation11], %s876
        %p878 = pneg %p172
        %p879 = pneg %p169
        %s880 = sand.u32 %s31, 1
        %s881 = scalar_lea.sflag [#allocation4], %s880
        %s882 = sand.u32 %s185, 1
        %s883 = smul.addr %s882, 16
        %s884 = scalar_lea.vmem [#allocation12], %s883
        %p885 = pneg %p198
        %p886 = pneg %p195
        %s887 = sand.u32 %s31, 1
        %s888 = scalar_lea.sflag [#allocation4], %s887
        %s889 = sand.u32 %s211, 1
        %s890 = scalar_lea.vmem [#allocation13], %s889
        %p891 = pneg %p224
        %p892 = pneg %p221
        %s893 = sand.u32 %s31, 1
        %s894 = scalar_lea.sflag [#allocation4], %s893
        %s895 = sand.u32 %s237, 1
        %s896 = scalar_lea.vmem [#allocation14], %s895
        %p897 = pneg %p250
        %p898 = pneg %p247
        %s899 = sand.u32 %s31, 1
        %s900 = scalar_lea.sflag [#allocation4], %s899
        %s901 = sand.u32 %s263, 1
        %s902 = scalar_lea.vmem [#allocation15], %s901
        %p903 = pneg %p276
        %p904 = pneg %p273
        %s905 = sand.u32 %s31, 1
        %s906 = scalar_lea.sflag [#allocation4], %s905
        %s907 = sand.u32 %s289, 1
        %s908 = smul.addr %s907, 16
        %s909 = scalar_lea.vmem [#allocation16], %s908
        %p910 = pneg %p302
        %p911 = pneg %p299
        %s912 = sand.u32 %s31, 1
        %s913 = scalar_lea.sflag [#allocation4], %s912
        %s914 = sand.u32 %s315, 1
        %s915 = scalar_lea.vmem [#allocation17], %s914
        %p916 = pneg %p328
        %p917 = pneg %p325
        %s918 = sand.u32 %s31, 1
        %s919 = scalar_lea.sflag [#allocation4], %s918
        %s920 = sand.u32 %s341, 1
        %s921 = smul.addr %s920, 64
        %s922 = scalar_lea.vmem [#allocation18], %s921
        %p923 = pneg %p354
        %p924 = pneg %p351
        %s925 = sand.u32 %s31, 1
        %s926 = scalar_lea.sflag [#allocation4], %s925
        %s927 = sand.u32 %s367, 1
        %s928 = scalar_lea.vmem [#allocation19], %s927
        %p929 = pneg %p380
        %p930 = pneg %p377
        %p931 = pneg %p401
        %p932 = pneg %p398
        %p933 = pneg %p422
        %p934 = pneg %p419
        %p935 = pneg %p443
        %p936 = pneg %p440
        %p938 = scmp.eq.s32.totalorder %s31, 0
        // Predicated region
        $region149: #{tpu_custom_call.1} parent=83 // pred_check
          %p939 = pneg %p938
        $region150: #{tpu_custom_call.1} parent=83 // pred_check_branch
          %941 = sbr.rel (%p939) target = $region152
        $region151: #{tpu_custom_call.1} parent=83 // pred_region
          %v942 = vld [vmem:[#allocation3] sm:$0xff]
          %v943 = vld [vmem:[#allocation3 + $0x8] sm:$0xff]
          %vm944 = vcmask 261120
          %945 = vst.msk [vmem:[#allocation2] sm:$0xff] %vm944, %v942
          %946 = vst.msk [vmem:[#allocation2 + $0x8] sm:$0xff] %vm944, %v943
        $region152: #{tpu_custom_call.1} parent=83 // pred_fallthru
          _
        %v947 = vld [vmem:[#allocation2] sm:$0xff]
        %v948 = vld [vmem:[#allocation2 + $0x8] sm:$0xff]
        %v949 = vld [vmem:[%s746] sm:$0x1]
        %v950 = vld [vmem:[%s754] sm:$0x1]
        %vm951 = vcmask 261120
        %v952 = vsel %vm951, %v947, 0.0
        %953 = vadd.xlane.f32.xlu0 %v952
        %v954 = vpop.xlane.xlu0 %953
        %v955 = vsel %vm951, %v948, 0.0
        %956 = vadd.xlane.f32.xlu0 %v955
        %v957 = vpop.xlane.xlu0 %956
        %v958 = vrcp.pop 32.0
        %v959 = vmul.f32 %v954, %v958
        %v960 = vmul.f32 %v957, %v958
        %v961 = vmul.f32 %v947, %v947
        %v962 = vmul.f32 %v948, %v948
        %v963 = vsel %vm951, %v961, 0.0
        %964 = vadd.xlane.f32.xlu0 %v963
        %v965 = vpop.xlane.xlu0 %964
        %v966 = vsel %vm951, %v962, 0.0
        %967 = vadd.xlane.f32.xlu0 %v966
        %v968 = vpop.xlane.xlu0 %967
        %v969 = vmul.f32 %v965, %v958
        %v970 = vmul.f32 %v968, %v958
        %v971 = vmul.f32 %v959, %v959
        %v972 = vmul.f32 %v960, %v960
        %v973 = vsub.f32 %v969, %v971
        %v974 = vsub.f32 %v970, %v972
        %v975 = vsub.f32 %v947, %v959
        %v976 = vsub.f32 %v948, %v960
        %v977 = vadd.f32 %v973, 1e-05
        %v978 = vadd.f32 %v974, 1e-05
        %v979 = vrsqrt.pop %v977
        %v980 = vrsqrt.pop %v978
        %v981 = vmul.f32 %v975, %v979
        %v982 = vmul.f32 %v976, %v980
        %v984 = vlaneseq
        %v985 = vshrl.u32 %v984, 7
        %v986 = vsub.s32 0, %v985
        %v987 = vrot.slane %v949, %v986
        %v989 = vmul.f32 %v981, %v987
        %v990 = vmul.f32 %v982, %v987
        %v992 = vlaneseq
        %v993 = vshrl.u32 %v992, 7
        %v994 = vsub.s32 0, %v993
        %v995 = vrot.slane %v950, %v994
        %v997 = vadd.f32 %v989, %v995
        %v998 = vadd.f32 %v990, %v995
        %v999 = vpack.c.bf16 %v998, %v997
        %v1000 = vld [vmem:[%s763] sm:$0xf]
        %v1001 = vld [vmem:[%s763 + $0x4] sm:$0xf]
        %v1002 = vld [vmem:[%s763 + $0x8] sm:$0xf]
        %v1003 = vld [vmem:[%s763 + $0xc] sm:$0xf]
        %v1004 = vld [vmem:[%s771] sm:$0x1]
        %v1006 = vlaneseq
        %v1007 = vshrl.u32 %v1006, 7
        %v1008 = vsub.s32 0, %v1007
        %v1009 = vrot.slane %v1004, %v1008
        %v1015 = vunpack.c.l.b16 %v1000
        %v1016 = vunpack.c.l.b16 %v1001
        %v1017 = vunpack.c.l.b16 %v1002
        %v1018 = vunpack.c.l.b16 %v1003
        %v1019 = vpack.c.b16 %v1016, %v1015
        %v1020 = vpack.c.b16 %v1018, %v1017
        %v1024 = vsel %vm951, %v999, 0
        %1026 = vmatprep.subr.bf16.mxu0 0
        %1027 = vmatpush1.bf16.msra.mxu0 %v1019
        %1028 = vmatprep.subr.bf16.mxu0 0
        %1029 = vmatpush1.bf16.msra.mxu0 %v1020
        %1030 = vmatprep.subr.bf16.mxu0 0
        %1031 = vmatpush1.bf16.msra.mxu0 0
        %1032 = vmatprep.subr.bf16.mxu0 0
        %1033 = vmatpush1.bf16.msra.mxu0 0
        %1034 = vmatprep.subr.bf16.mxu0 0
        %1035 = vmatpush1.bf16.msra.mxu0 0
        %1036 = vmatprep.subr.bf16.mxu0 0
        %1037 = vmatpush1.bf16.msra.mxu0 0
        %1038 = vmatprep.subr.bf16.mxu0 0
        %1039 = vmatpush1.bf16.msra.mxu0 0
        %1040 = vmatprep.subr.bf16.mxu0 0
        %1041 = vmatpush1.bf16.msra.mxu0 0
        %1042 = vmatprep.subr.bf16.mxu0 0
        %1043 = vmatpush1.bf16.msra.mxu0 0
        %1044 = vmatprep.subr.bf16.mxu0 0
        %1045 = vmatpush1.bf16.msra.mxu0 0
        %1046 = vmatprep.subr.bf16.mxu0 0
        %1047 = vmatpush1.bf16.msra.mxu0 0
        %1048 = vmatprep.subr.bf16.mxu0 0
        %1049 = vmatpush1.bf16.msra.mxu0 0
        %1050 = vmatprep.subr.bf16.mxu0 0
        %1051 = vmatpush1.bf16.msra.mxu0 0
        %1052 = vmatprep.subr.bf16.mxu0 0
        %1053 = vmatpush1.bf16.msra.mxu0 0
        %1054 = vmatprep.subr.bf16.mxu0 0
        %1055 = vmatpush1.bf16.msra.mxu0 0
        %1056 = vmatprep.subr.bf16.mxu0 0
        %1057 = vmatpush1.bf16.msra.mxu0 0
        %1058 = vmatprep.mubr.bf16.mxu0 0
        %1059 = vmatmul.mubr.bf16.gmra.mrb[0].mxu0 %v1024
        %v1060 = vpop.f32.mrb[0].mxu0
        %v1061 = vadd.f32 %v1009, %v1060
        %v1062 = vpop.f32.mrb[0].mxu0
        %v1063 = vpop.f32.mrb[0].mxu0
        %v1064 = vadd.f32 %v1009, %v1063
        %v1065 = vpop.f32.mrb[0].mxu0
        %1066 = vdwg.mxu0
        %1069 = vrot.lane.b32.xlu0 %v1061, 120
        %v1070 = vpop.permute.xlu0 %1069
        %1071 = vrot.lane.b32.xlu0 %v1064, 120
        %v1072 = vpop.permute.xlu0 %1071
        %1075 = vrot.lane.b32.xlu0 %v1061, 112
        %v1076 = vpop.permute.xlu0 %1075
        %1077 = vrot.lane.b32.xlu0 %v1064, 112
        %v1078 = vpop.permute.xlu0 %1077
        %1081 = vrot.lane.b32.xlu0 %v1061, 104
        %v1082 = vpop.permute.xlu0 %1081
        %1083 = vrot.lane.b32.xlu0 %v1064, 104
        %v1084 = vpop.permute.xlu0 %1083
        %v1087 = vpack.c.bf16 %v1061, %v1061
        %v1088 = vpack.c.bf16 %v1064, %v1064
        %v1089 = vpack.c.bf16 %v1070, %v1070
        %v1090 = vpack.c.bf16 %v1072, %v1072
        %v1091 = vpack.c.bf16 %v1076, %v1076
        %v1092 = vpack.c.bf16 %v1078, %v1078
        %v1093 = vpack.c.bf16 %v1082, %v1082
        %v1094 = vpack.c.bf16 %v1084, %v1084
        %v1095 = vld [vmem:[#allocation6] sm:$0xff]
        %1097 = vrot.lane.b32.xlu0 %v1087, 96
        %v1098 = vpop.permute.xlu0 %1097
        %vm1099 = vcmask 64512
        %v1101 = vsel %vm1099, %v1087, 0
        %v1104 = vsel %vm1099, %v1098, 0
        %1106 = vmatprep.subr.bf16.mxu0 0
        %1107 = vmatpush1.bf16.xpose.msra.mxu0 %v1104
        %1108 = vmatprep.subr.bf16.mxu0 0
        %1109 = vmatpush1.bf16.xpose.msra.mxu0 0
        %1110 = vmatprep.subr.bf16.mxu0 0
        %1111 = vmatpush1.bf16.xpose.msra.mxu0 0
        %1112 = vmatprep.subr.bf16.mxu0 0
        %1113 = vmatpush1.bf16.xpose.msra.mxu0 0
        %1114 = vmatprep.subr.bf16.mxu0 0
        %1115 = vmatpush1.bf16.xpose.msra.mxu0 0
        %1116 = vmatprep.subr.bf16.mxu0 0
        %1117 = vmatpush1.bf16.xpose.msra.mxu0 0
        %1118 = vmatprep.subr.bf16.mxu0 0
        %1119 = vmatpush1.bf16.xpose.msra.mxu0 0
        %1120 = vmatprep.subr.bf16.mxu0 0
        %1121 = vmatpush1.bf16.xpose.msra.mxu0 0
        %1122 = vmatprep.subr.bf16.mxu0 0
        %1123 = vmatpush1.bf16.xpose.msra.mxu0 0
        %1124 = vmatprep.subr.bf16.mxu0 0
        %1125 = vmatpush1.bf16.xpose.msra.mxu0 0
        %1126 = vmatprep.subr.bf16.mxu0 0
        %1127 = vmatpush1.bf16.xpose.msra.mxu0 0
        %1128 = vmatprep.subr.bf16.mxu0 0
        %1129 = vmatpush1.bf16.xpose.msra.mxu0 0
        %1130 = vmatprep.subr.bf16.mxu0 0
        %1131 = vmatpush1.bf16.xpose.msra.mxu0 0
        %1132 = vmatprep.subr.bf16.mxu0 0
        %1133 = vmatpush1.bf16.xpose.msra.mxu0 0
        %1134 = vmatprep.subr.bf16.mxu0 0
        %1135 = vmatpush1.bf16.xpose.msra.mxu0 0
        %1136 = vmatprep.subr.bf16.mxu0 0
        %1137 = vmatpush1.bf16.xpose.msra.mxu0 0
        %1138 = vmatprep.mubr.bf16.mxu0 0
        %1139 = vmatmul.mubr.bf16.gmra.mrb[0].mxu0 %v1101
        %v1140 = vpop.f32.mrb[0].mxu0
        %v1141 = vadd.f32 %v1095, %v1140
        %v1142 = vpop.f32.mrb[0].mxu0
        %v1143 = vpop.f32.mrb[0].mxu0
        %v1144 = vpop.f32.mrb[0].mxu0
        %1145 = vdwg.mxu0
        %1147 = vrot.lane.b32.xlu0 %v1088, 96
        %v1148 = vpop.permute.xlu0 %1147
        %v1150 = vsel %vm1099, %v1088, 0
        %v1153 = vsel %vm1099, %v1148, 0
        %1155 = vmatprep.subr.bf16.mxu0 0
        %1156 = vmatpush1.bf16.xpose.msra.mxu0 %v1153
        %1157 = vmatprep.subr.bf16.mxu0 0
        %1158 = vmatpush1.bf16.xpose.msra.mxu0 0
        %1159 = vmatprep.subr.bf16.mxu0 0
        %1160 = vmatpush1.bf16.xpose.msra.mxu0 0
        %1161 = vmatprep.subr.bf16.mxu0 0
        %1162 = vmatpush1.bf16.xpose.msra.mxu0 0
        %1163 = vmatprep.subr.bf16.mxu0 0
        %1164 = vmatpush1.bf16.xpose.msra.mxu0 0
        %1165 = vmatprep.subr.bf16.mxu0 0
        %1166 = vmatpush1.bf16.xpose.msra.mxu0 0
        %1167 = vmatprep.subr.bf16.mxu0 0
        %1168 = vmatpush1.bf16.xpose.msra.mxu0 0
        %1169 = vmatprep.subr.bf16.mxu0 0
        %1170 = vmatpush1.bf16.xpose.msra.mxu0 0
        %1171 = vmatprep.subr.bf16.mxu0 0
        %1172 = vmatpush1.bf16.xpose.msra.mxu0 0
        %1173 = vmatprep.subr.bf16.mxu0 0
        %1174 = vmatpush1.bf16.xpose.msra.mxu0 0
        %1175 = vmatprep.subr.bf16.mxu0 0
        %1176 = vmatpush1.bf16.xpose.msra.mxu0 0
        %1177 = vmatprep.subr.bf16.mxu0 0
        %1178 = vmatpush1.bf16.xpose.msra.mxu0 0
        %1179 = vmatprep.subr.bf16.mxu0 0
        %1180 = vmatpush1.bf16.xpose.msra.mxu0 0
        %1181 = vmatprep.subr.bf16.mxu0 0
        %1182 = vmatpush1.bf16.xpose.msra.mxu0 0
        %1183 = vmatprep.subr.bf16.mxu0 0
        %1184 = vmatpush1.bf16.xpose.msra.mxu0 0
        %1185 = vmatprep.subr.bf16.mxu0 0
        %1186 = vmatpush1.bf16.xpose.msra.mxu0 0
        %1187 = vmatprep.mubr.bf16.mxu0 0
        %1188 = vmatmul.mubr.bf16.gmra.mrb[0].mxu0 %v1150
        %v1189 = vpop.f32.mrb[0].mxu0
        %v1190 = vadd.f32 %v1095, %v1189
        %v1191 = vpop.f32.mrb[0].mxu0
        %v1192 = vpop.f32.mrb[0].mxu0
        %v1193 = vpop.f32.mrb[0].mxu0
        %1194 = vdwg.mxu0
        %1196 = vrot.lane.b32.xlu0 %v1089, 96
        %v1197 = vpop.permute.xlu0 %1196
        %v1199 = vsel %vm1099, %v1089, 0
        %v1202 = vsel %vm1099, %v1197, 0
        %1204 = vmatprep.subr.bf16.mxu0 0
        %1205 = vmatpush1.bf16.xpose.msra.mxu0 %v1202
        %1206 = vmatprep.subr.bf16.mxu0 0
        %1207 = vmatpush1.bf16.xpose.msra.mxu0 0
        %1208 = vmatprep.subr.bf16.mxu0 0
        %1209 = vmatpush1.bf16.xpose.msra.mxu0 0
        %1210 = vmatprep.subr.bf16.mxu0 0
        %1211 = vmatpush1.bf16.xpose.msra.mxu0 0
        %1212 = vmatprep.subr.bf16.mxu0 0
        %1213 = vmatpush1.bf16.xpose.msra.mxu0 0
        %1214 = vmatprep.subr.bf16.mxu0 0
        %1215 = vmatpush1.bf16.xpose.msra.mxu0 0
        %1216 = vmatprep.subr.bf16.mxu0 0
        %1217 = vmatpush1.bf16.xpose.msra.mxu0 0
        %1218 = vmatprep.subr.bf16.mxu0 0
        %1219 = vmatpush1.bf16.xpose.msra.mxu0 0
        %1220 = vmatprep.subr.bf16.mxu0 0
        %1221 = vmatpush1.bf16.xpose.msra.mxu0 0
        %1222 = vmatprep.subr.bf16.mxu0 0
        %1223 = vmatpush1.bf16.xpose.msra.mxu0 0
        %1224 = vmatprep.subr.bf16.mxu0 0
        %1225 = vmatpush1.bf16.xpose.msra.mxu0 0
        %1226 = vmatprep.subr.bf16.mxu0 0
        %1227 = vmatpush1.bf16.xpose.msra.mxu0 0
        %1228 = vmatprep.subr.bf16.mxu0 0
        %1229 = vmatpush1.bf16.xpose.msra.mxu0 0
        %1230 = vmatprep.subr.bf16.mxu0 0
        %1231 = vmatpush1.bf16.xpose.msra.mxu0 0
        %1232 = vmatprep.subr.bf16.mxu0 0
        %1233 = vmatpush1.bf16.xpose.msra.mxu0 0
        %1234 = vmatprep.subr.bf16.mxu0 0
        %1235 = vmatpush1.bf16.xpose.msra.mxu0 0
        %1236 = vmatprep.mubr.bf16.mxu0 0
        %1237 = vmatmul.mubr.bf16.gmra.mrb[0].mxu0 %v1199
        %v1238 = vpop.f32.mrb[0].mxu0
        %v1239 = vadd.f32 %v1095, %v1238
        %v1240 = vpop.f32.mrb[0].mxu0
        %v1241 = vpop.f32.mrb[0].mxu0
        %v1242 = vpop.f32.mrb[0].mxu0
        %1243 = vdwg.mxu0
        %1245 = vrot.lane.b32.xlu0 %v1090, 96
        %v1246 = vpop.permute.xlu0 %1245
        %v1248 = vsel %vm1099, %v1090, 0
        %v1251 = vsel %vm1099, %v1246, 0
        %1253 = vmatprep.subr.bf16.mxu0 0
        %1254 = vmatpush1.bf16.xpose.msra.mxu0 %v1251
        %1255 = vmatprep.subr.bf16.mxu0 0
        %1256 = vmatpush1.bf16.xpose.msra.mxu0 0
        %1257 = vmatprep.subr.bf16.mxu0 0
        %1258 = vmatpush1.bf16.xpose.msra.mxu0 0
        %1259 = vmatprep.subr.bf16.mxu0 0
        %1260 = vmatpush1.bf16.xpose.msra.mxu0 0
        %1261 = vmatprep.subr.bf16.mxu0 0
        %1262 = vmatpush1.bf16.xpose.msra.mxu0 0
        %1263 = vmatprep.subr.bf16.mxu0 0
        %1264 = vmatpush1.bf16.xpose.msra.mxu0 0
        %1265 = vmatprep.subr.bf16.mxu0 0
        %1266 = vmatpush1.bf16.xpose.msra.mxu0 0
        %1267 = vmatprep.subr.bf16.mxu0 0
        %1268 = vmatpush1.bf16.xpose.msra.mxu0 0
        %1269 = vmatprep.subr.bf16.mxu0 0
        %1270 = vmatpush1.bf16.xpose.msra.mxu0 0
        %1271 = vmatprep.subr.bf16.mxu0 0
        %1272 = vmatpush1.bf16.xpose.msra.mxu0 0
        %1273 = vmatprep.subr.bf16.mxu0 0
        %1274 = vmatpush1.bf16.xpose.msra.mxu0 0
        %1275 = vmatprep.subr.bf16.mxu0 0
        %1276 = vmatpush1.bf16.xpose.msra.mxu0 0
        %1277 = vmatprep.subr.bf16.mxu0 0
        %1278 = vmatpush1.bf16.xpose.msra.mxu0 0
        %1279 = vmatprep.subr.bf16.mxu0 0
        %1280 = vmatpush1.bf16.xpose.msra.mxu0 0
        %1281 = vmatprep.subr.bf16.mxu0 0
        %1282 = vmatpush1.bf16.xpose.msra.mxu0 0
        %1283 = vmatprep.subr.bf16.mxu0 0
        %1284 = vmatpush1.bf16.xpose.msra.mxu0 0
        %1285 = vmatprep.mubr.bf16.mxu0 0
        %1286 = vmatmul.mubr.bf16.gmra.mrb[0].mxu0 %v1248
        %v1287 = vpop.f32.mrb[0].mxu0
        %v1288 = vadd.f32 %v1095, %v1287
        %v1289 = vpop.f32.mrb[0].mxu0
        %v1290 = vpop.f32.mrb[0].mxu0
        %v1291 = vpop.f32.mrb[0].mxu0
        %1292 = vdwg.mxu0
        %1294 = vrot.lane.b32.xlu0 %v1091, 96
        %v1295 = vpop.permute.xlu0 %1294
        %v1297 = vsel %vm1099, %v1091, 0
        %v1300 = vsel %vm1099, %v1295, 0
        %1302 = vmatprep.subr.bf16.mxu0 0
        %1303 = vmatpush1.bf16.xpose.msra.mxu0 %v1300
        %1304 = vmatprep.subr.bf16.mxu0 0
        %1305 = vmatpush1.bf16.xpose.msra.mxu0 0
        %1306 = vmatprep.subr.bf16.mxu0 0
        %1307 = vmatpush1.bf16.xpose.msra.mxu0 0
        %1308 = vmatprep.subr.bf16.mxu0 0
        %1309 = vmatpush1.bf16.xpose.msra.mxu0 0
        %1310 = vmatprep.subr.bf16.mxu0 0
        %1311 = vmatpush1.bf16.xpose.msra.mxu0 0
        %1312 = vmatprep.subr.bf16.mxu0 0
        %1313 = vmatpush1.bf16.xpose.msra.mxu0 0
        %1314 = vmatprep.subr.bf16.mxu0 0
        %1315 = vmatpush1.bf16.xpose.msra.mxu0 0
        %1316 = vmatprep.subr.bf16.mxu0 0
        %1317 = vmatpush1.bf16.xpose.msra.mxu0 0
        %1318 = vmatprep.subr.bf16.mxu0 0
        %1319 = vmatpush1.bf16.xpose.msra.mxu0 0
        %1320 = vmatprep.subr.bf16.mxu0 0
        %1321 = vmatpush1.bf16.xpose.msra.mxu0 0
        %1322 = vmatprep.subr.bf16.mxu0 0
        %1323 = vmatpush1.bf16.xpose.msra.mxu0 0
        %1324 = vmatprep.subr.bf16.mxu0 0
        %1325 = vmatpush1.bf16.xpose.msra.mxu0 0
        %1326 = vmatprep.subr.bf16.mxu0 0
        %1327 = vmatpush1.bf16.xpose.msra.mxu0 0
        %1328 = vmatprep.subr.bf16.mxu0 0
        %1329 = vmatpush1.bf16.xpose.msra.mxu0 0
        %1330 = vmatprep.subr.bf16.mxu0 0
        %1331 = vmatpush1.bf16.xpose.msra.mxu0 0
        %1332 = vmatprep.subr.bf16.mxu0 0
        %1333 = vmatpush1.bf16.xpose.msra.mxu0 0
        %1334 = vmatprep.mubr.bf16.mxu0 0
        %1335 = vmatmul.mubr.bf16.gmra.mrb[0].mxu0 %v1297
        %v1336 = vpop.f32.mrb[0].mxu0
        %v1337 = vadd.f32 %v1095, %v1336
        %v1338 = vpop.f32.mrb[0].mxu0
        %v1339 = vpop.f32.mrb[0].mxu0
        %v1340 = vpop.f32.mrb[0].mxu0
        %1341 = vdwg.mxu0
        %1343 = vrot.lane.b32.xlu0 %v1092, 96
        %v1344 = vpop.permute.xlu0 %1343
        %v1346 = vsel %vm1099, %v1092, 0
        %v1349 = vsel %vm1099, %v1344, 0
        %1351 = vmatprep.subr.bf16.mxu0 0
        %1352 = vmatpush1.bf16.xpose.msra.mxu0 %v1349
        %1353 = vmatprep.subr.bf16.mxu0 0
        %1354 = vmatpush1.bf16.xpose.msra.mxu0 0
        %1355 = vmatprep.subr.bf16.mxu0 0
        %1356 = vmatpush1.bf16.xpose.msra.mxu0 0
        %1357 = vmatprep.subr.bf16.mxu0 0
        %1358 = vmatpush1.bf16.xpose.msra.mxu0 0
        %1359 = vmatprep.subr.bf16.mxu0 0
        %1360 = vmatpush1.bf16.xpose.msra.mxu0 0
        %1361 = vmatprep.subr.bf16.mxu0 0
        %1362 = vmatpush1.bf16.xpose.msra.mxu0 0
        %1363 = vmatprep.subr.bf16.mxu0 0
        %1364 = vmatpush1.bf16.xpose.msra.mxu0 0
        %1365 = vmatprep.subr.bf16.mxu0 0
        %1366 = vmatpush1.bf16.xpose.msra.mxu0 0
        %1367 = vmatprep.subr.bf16.mxu0 0
        %1368 = vmatpush1.bf16.xpose.msra.mxu0 0
        %1369 = vmatprep.subr.bf16.mxu0 0
        %1370 = vmatpush1.bf16.xpose.msra.mxu0 0
        %1371 = vmatprep.subr.bf16.mxu0 0
        %1372 = vmatpush1.bf16.xpose.msra.mxu0 0
        %1373 = vmatprep.subr.bf16.mxu0 0
        %1374 = vmatpush1.bf16.xpose.msra.mxu0 0
        %1375 = vmatprep.subr.bf16.mxu0 0
        %1376 = vmatpush1.bf16.xpose.msra.mxu0 0
        %1377 = vmatprep.subr.bf16.mxu0 0
        %1378 = vmatpush1.bf16.xpose.msra.mxu0 0
        %1379 = vmatprep.subr.bf16.mxu0 0
        %1380 = vmatpush1.bf16.xpose.msra.mxu0 0
        %1381 = vmatprep.subr.bf16.mxu0 0
        %1382 = vmatpush1.bf16.xpose.msra.mxu0 0
        %1383 = vmatprep.mubr.bf16.mxu0 0
        %1384 = vmatmul.mubr.bf16.gmra.mrb[0].mxu0 %v1346
        %v1385 = vpop.f32.mrb[0].mxu0
        %v1386 = vadd.f32 %v1095, %v1385
        %v1387 = vpop.f32.mrb[0].mxu0
        %v1388 = vpop.f32.mrb[0].mxu0
        %v1389 = vpop.f32.mrb[0].mxu0
        %1390 = vdwg.mxu0
        %1392 = vrot.lane.b32.xlu0 %v1093, 96
        %v1393 = vpop.permute.xlu0 %1392
        %v1395 = vsel %vm1099, %v1093, 0
        %v1398 = vsel %vm1099, %v1393, 0
        %1400 = vmatprep.subr.bf16.mxu0 0
        %1401 = vmatpush1.bf16.xpose.msra.mxu0 %v1398
        %1402 = vmatprep.subr.bf16.mxu0 0
        %1403 = vmatpush1.bf16.xpose.msra.mxu0 0
        %1404 = vmatprep.subr.bf16.mxu0 0
        %1405 = vmatpush1.bf16.xpose.msra.mxu0 0
        %1406 = vmatprep.subr.bf16.mxu0 0
        %1407 = vmatpush1.bf16.xpose.msra.mxu0 0
        %1408 = vmatprep.subr.bf16.mxu0 0
        %1409 = vmatpush1.bf16.xpose.msra.mxu0 0
        %1410 = vmatprep.subr.bf16.mxu0 0
        %1411 = vmatpush1.bf16.xpose.msra.mxu0 0
        %1412 = vmatprep.subr.bf16.mxu0 0
        %1413 = vmatpush1.bf16.xpose.msra.mxu0 0
        %1414 = vmatprep.subr.bf16.mxu0 0
        %1415 = vmatpush1.bf16.xpose.msra.mxu0 0
        %1416 = vmatprep.subr.bf16.mxu0 0
        %1417 = vmatpush1.bf16.xpose.msra.mxu0 0
        %1418 = vmatprep.subr.bf16.mxu0 0
        %1419 = vmatpush1.bf16.xpose.msra.mxu0 0
        %1420 = vmatprep.subr.bf16.mxu0 0
        %1421 = vmatpush1.bf16.xpose.msra.mxu0 0
        %1422 = vmatprep.subr.bf16.mxu0 0
        %1423 = vmatpush1.bf16.xpose.msra.mxu0 0
        %1424 = vmatprep.subr.bf16.mxu0 0
        %1425 = vmatpush1.bf16.xpose.msra.mxu0 0
        %1426 = vmatprep.subr.bf16.mxu0 0
        %1427 = vmatpush1.bf16.xpose.msra.mxu0 0
        %1428 = vmatprep.subr.bf16.mxu0 0
        %1429 = vmatpush1.bf16.xpose.msra.mxu0 0
        %1430 = vmatprep.subr.bf16.mxu0 0
        %1431 = vmatpush1.bf16.xpose.msra.mxu0 0
        %1432 = vmatprep.mubr.bf16.mxu0 0
        %1433 = vmatmul.mubr.bf16.gmra.mrb[0].mxu0 %v1395
        %v1434 = vpop.f32.mrb[0].mxu0
        %v1435 = vadd.f32 %v1095, %v1434
        %v1436 = vpop.f32.mrb[0].mxu0
        %v1437 = vpop.f32.mrb[0].mxu0
        %v1438 = vpop.f32.mrb[0].mxu0
        %1439 = vdwg.mxu0
        %1441 = vrot.lane.b32.xlu0 %v1094, 96
        %v1442 = vpop.permute.xlu0 %1441
        %v1444 = vsel %vm1099, %v1094, 0
        %v1447 = vsel %vm1099, %v1442, 0
        %1449 = vmatprep.subr.bf16.mxu0 0
        %1450 = vmatpush1.bf16.xpose.msra.mxu0 %v1447
        %1451 = vmatprep.subr.bf16.mxu0 0
        %1452 = vmatpush1.bf16.xpose.msra.mxu0 0
        %1453 = vmatprep.subr.bf16.mxu0 0
        %1454 = vmatpush1.bf16.xpose.msra.mxu0 0
        %1455 = vmatprep.subr.bf16.mxu0 0
        %1456 = vmatpush1.bf16.xpose.msra.mxu0 0
        %1457 = vmatprep.subr.bf16.mxu0 0
        %1458 = vmatpush1.bf16.xpose.msra.mxu0 0
        %1459 = vmatprep.subr.bf16.mxu0 0
        %1460 = vmatpush1.bf16.xpose.msra.mxu0 0
        %1461 = vmatprep.subr.bf16.mxu0 0
        %1462 = vmatpush1.bf16.xpose.msra.mxu0 0
        %1463 = vmatprep.subr.bf16.mxu0 0
        %1464 = vmatpush1.bf16.xpose.msra.mxu0 0
        %1465 = vmatprep.subr.bf16.mxu0 0
        %1466 = vmatpush1.bf16.xpose.msra.mxu0 0
        %1467 = vmatprep.subr.bf16.mxu0 0
        %1468 = vmatpush1.bf16.xpose.msra.mxu0 0
        %1469 = vmatprep.subr.bf16.mxu0 0
        %1470 = vmatpush1.bf16.xpose.msra.mxu0 0
        %1471 = vmatprep.subr.bf16.mxu0 0
        %1472 = vmatpush1.bf16.xpose.msra.mxu0 0
        %1473 = vmatprep.subr.bf16.mxu0 0
        %1474 = vmatpush1.bf16.xpose.msra.mxu0 0
        %1475 = vmatprep.subr.bf16.mxu0 0
        %1476 = vmatpush1.bf16.xpose.msra.mxu0 0
        %1477 = vmatprep.subr.bf16.mxu0 0
        %1478 = vmatpush1.bf16.xpose.msra.mxu0 0
        %1479 = vmatprep.subr.bf16.mxu0 0
        %1480 = vmatpush1.bf16.xpose.msra.mxu0 0
        %1481 = vmatprep.mubr.bf16.mxu0 0
        %1482 = vmatmul.mubr.bf16.gmra.mrb[0].mxu0 %v1444
        %v1483 = vpop.f32.mrb[0].mxu0
        %v1484 = vadd.f32 %v1095, %v1483
        %v1485 = vpop.f32.mrb[0].mxu0
        %v1486 = vpop.f32.mrb[0].mxu0
        %v1487 = vpop.f32.mrb[0].mxu0
        %1488 = vdwg.mxu0
        %v1489 = vsel %vm1099, %v1141, -inf
        %1490 = vmax.xlane.f32.xlu0 %v1489
        %v1491 = vpop.xlane.xlu0 %1490
        %v1492 = vsel %vm1099, %v1190, -inf
        %1493 = vmax.xlane.f32.xlu0 %v1492
        %v1494 = vpop.xlane.xlu0 %1493
        %v1495 = vsel %vm1099, %v1239, -inf
        %1496 = vmax.xlane.f32.xlu0 %v1495
        %v1497 = vpop.xlane.xlu0 %1496
        %v1498 = vsel %vm1099, %v1288, -inf
        %1499 = vmax.xlane.f32.xlu0 %v1498
        %v1500 = vpop.xlane.xlu0 %1499
        %v1501 = vsel %vm1099, %v1337, -inf
        %1502 = vmax.xlane.f32.xlu0 %v1501
        %v1503 = vpop.xlane.xlu0 %1502
        %v1504 = vsel %vm1099, %v1386, -inf
        %1505 = vmax.xlane.f32.xlu0 %v1504
        %v1506 = vpop.xlane.xlu0 %1505
        %v1507 = vsel %vm1099, %v1435, -inf
        %1508 = vmax.xlane.f32.xlu0 %v1507
        %v1509 = vpop.xlane.xlu0 %1508
        %v1510 = vsel %vm1099, %v1484, -inf
        %1511 = vmax.xlane.f32.xlu0 %v1510
        %v1512 = vpop.xlane.xlu0 %1511
        %v1513 = vsub.f32 %v1141, %v1491
        %v1514 = vsub.f32 %v1190, %v1494
        %v1515 = vsub.f32 %v1239, %v1497
        %v1516 = vsub.f32 %v1288, %v1500
        %v1517 = vsub.f32 %v1337, %v1503
        %v1518 = vsub.f32 %v1386, %v1506
        %v1519 = vsub.f32 %v1435, %v1509
        %v1520 = vsub.f32 %v1484, %v1512
        %v1521 = vmul.f32 %v1513, 1.442695
        %v1522 = vpow.pop %v1521
        %v1523 = vmul.f32 %v1514, 1.442695
        %v1524 = vpow.pop %v1523
        %v1525 = vmul.f32 %v1515, 1.442695
        %v1526 = vpow.pop %v1525
        %v1527 = vmul.f32 %v1516, 1.442695
        %v1528 = vpow.pop %v1527
        %v1529 = vmul.f32 %v1517, 1.442695
        %v1530 = vpow.pop %v1529
        %v1531 = vmul.f32 %v1518, 1.442695
        %v1532 = vpow.pop %v1531
        %v1533 = vmul.f32 %v1519, 1.442695
        %v1534 = vpow.pop %v1533
        %v1535 = vmul.f32 %v1520, 1.442695
        %v1536 = vpow.pop %v1535
        %v1537 = vsel %vm1099, %v1522, 0.0
        %1538 = vadd.xlane.f32.xlu0 %v1537
        %v1539 = vpop.xlane.xlu0 %1538
        %v1540 = vsel %vm1099, %v1524, 0.0
        %1541 = vadd.xlane.f32.xlu0 %v1540
        %v1542 = vpop.xlane.xlu0 %1541
        %v1543 = vsel %vm1099, %v1526, 0.0
        %1544 = vadd.xlane.f32.xlu0 %v1543
        %v1545 = vpop.xlane.xlu0 %1544
        %v1546 = vsel %vm1099, %v1528, 0.0
        %1547 = vadd.xlane.f32.xlu0 %v1546
        %v1548 = vpop.xlane.xlu0 %1547
        %v1549 = vsel %vm1099, %v1530, 0.0
        %1550 = vadd.xlane.f32.xlu0 %v1549
        %v1551 = vpop.xlane.xlu0 %1550
        %v1552 = vsel %vm1099, %v1532, 0.0
        %1553 = vadd.xlane.f32.xlu0 %v1552
        %v1554 = vpop.xlane.xlu0 %1553
        %v1555 = vsel %vm1099, %v1534, 0.0
        %1556 = vadd.xlane.f32.xlu0 %v1555
        %v1557 = vpop.xlane.xlu0 %1556
        %v1558 = vsel %vm1099, %v1536, 0.0
        %1559 = vadd.xlane.f32.xlu0 %v1558
        %v1560 = vpop.xlane.xlu0 %1559
        %v1561 = vrcp.pop %v1539
        %v1562 = vrcp.pop %v1542
        %v1563 = vrcp.pop %v1545
        %v1564 = vrcp.pop %v1548
        %v1565 = vrcp.pop %v1551
        %v1566 = vrcp.pop %v1554
        %v1567 = vrcp.pop %v1557
        %v1568 = vrcp.pop %v1560
        %v1569 = vmul.f32 %v1522, %v1561
        %v1570 = vmul.f32 %v1524, %v1562
        %v1571 = vmul.f32 %v1526, %v1563
        %v1572 = vmul.f32 %v1528, %v1564
        %v1573 = vmul.f32 %v1530, %v1565
        %v1574 = vmul.f32 %v1532, %v1566
        %v1575 = vmul.f32 %v1534, %v1567
        %v1576 = vmul.f32 %v1536, %v1568
        %v1577 = vpack.c.bf16 %v1569, %v1569
        %v1578 = vpack.c.bf16 %v1570, %v1570
        %v1579 = vpack.c.bf16 %v1571, %v1571
        %v1580 = vpack.c.bf16 %v1572, %v1572
        %v1581 = vpack.c.bf16 %v1573, %v1573
        %v1582 = vpack.c.bf16 %v1574, %v1574
        %v1583 = vpack.c.bf16 %v1575, %v1575
        %v1584 = vpack.c.bf16 %v1576, %v1576
        %1585 = vrot.lane.b32.xlu0 %v1087, 64
        %v1586 = vpop.permute.xlu0 %1585
        %v1588 = vsel %vm1099, %v1577, 0
        %vm1590 = vcmask 1043456
        %v1592 = vsel %vm1590, %v1586, 0
        %1594 = vmatprep.subr.bf16.mxu0 0
        %1595 = vmatpush1.bf16.msra.mxu0 %v1592
        %1596 = vmatprep.subr.bf16.mxu0 0
        %1597 = vmatpush1.bf16.msra.mxu0 0
        %1598 = vmatprep.subr.bf16.mxu0 0
        %1599 = vmatpush1.bf16.msra.mxu0 0
        %1600 = vmatprep.subr.bf16.mxu0 0
        %1601 = vmatpush1.bf16.msra.mxu0 0
        %1602 = vmatprep.subr.bf16.mxu0 0
        %1603 = vmatpush1.bf16.msra.mxu0 0
        %1604 = vmatprep.subr.bf16.mxu0 0
        %1605 = vmatpush1.bf16.msra.mxu0 0
        %1606 = vmatprep.subr.bf16.mxu0 0
        %1607 = vmatpush1.bf16.msra.mxu0 0
        %1608 = vmatprep.subr.bf16.mxu0 0
        %1609 = vmatpush1.bf16.msra.mxu0 0
        %1610 = vmatprep.subr.bf16.mxu0 0
        %1611 = vmatpush1.bf16.msra.mxu0 0
        %1612 = vmatprep.subr.bf16.mxu0 0
        %1613 = vmatpush1.bf16.msra.mxu0 0
        %1614 = vmatprep.subr.bf16.mxu0 0
        %1615 = vmatpush1.bf16.msra.mxu0 0
        %1616 = vmatprep.subr.bf16.mxu0 0
        %1617 = vmatpush1.bf16.msra.mxu0 0
        %1618 = vmatprep.subr.bf16.mxu0 0
        %1619 = vmatpush1.bf16.msra.mxu0 0
        %1620 = vmatprep.subr.bf16.mxu0 0
        %1621 = vmatpush1.bf16.msra.mxu0 0
        %1622 = vmatprep.subr.bf16.mxu0 0
        %1623 = vmatpush1.bf16.msra.mxu0 0
        %1624 = vmatprep.subr.bf16.mxu0 0
        %1625 = vmatpush1.bf16.msra.mxu0 0
        %1626 = vmatprep.mubr.bf16.mxu0 0
        %1627 = vmatmul.mubr.bf16.gmra.mrb[0].mxu0 %v1588
        %v1628 = vpop.f32.mrb[0].mxu0
        %v1629 = vadd.f32 0.0, %v1628
        %v1630 = vpop.f32.mrb[0].mxu0
        %v1631 = vpop.f32.mrb[0].mxu0
        %v1632 = vpop.f32.mrb[0].mxu0
        %1633 = vdwg.mxu0
        %1634 = vrot.lane.b32.xlu0 %v1088, 64
        %v1635 = vpop.permute.xlu0 %1634
        %v1637 = vsel %vm1099, %v1578, 0
        %v1640 = vsel %vm1590, %v1635, 0
        %1642 = vmatprep.subr.bf16.mxu0 0
        %1643 = vmatpush1.bf16.msra.mxu0 %v1640
        %1644 = vmatprep.subr.bf16.mxu0 0
        %1645 = vmatpush1.bf16.msra.mxu0 0
        %1646 = vmatprep.subr.bf16.mxu0 0
        %1647 = vmatpush1.bf16.msra.mxu0 0
        %1648 = vmatprep.subr.bf16.mxu0 0
        %1649 = vmatpush1.bf16.msra.mxu0 0
        %1650 = vmatprep.subr.bf16.mxu0 0
        %1651 = vmatpush1.bf16.msra.mxu0 0
        %1652 = vmatprep.subr.bf16.mxu0 0
        %1653 = vmatpush1.bf16.msra.mxu0 0
        %1654 = vmatprep.subr.bf16.mxu0 0
        %1655 = vmatpush1.bf16.msra.mxu0 0
        %1656 = vmatprep.subr.bf16.mxu0 0
        %1657 = vmatpush1.bf16.msra.mxu0 0
        %1658 = vmatprep.subr.bf16.mxu0 0
        %1659 = vmatpush1.bf16.msra.mxu0 0
        %1660 = vmatprep.subr.bf16.mxu0 0
        %1661 = vmatpush1.bf16.msra.mxu0 0
        %1662 = vmatprep.subr.bf16.mxu0 0
        %1663 = vmatpush1.bf16.msra.mxu0 0
        %1664 = vmatprep.subr.bf16.mxu0 0
        %1665 = vmatpush1.bf16.msra.mxu0 0
        %1666 = vmatprep.subr.bf16.mxu0 0
        %1667 = vmatpush1.bf16.msra.mxu0 0
        %1668 = vmatprep.subr.bf16.mxu0 0
        %1669 = vmatpush1.bf16.msra.mxu0 0
        %1670 = vmatprep.subr.bf16.mxu0 0
        %1671 = vmatpush1.bf16.msra.mxu0 0
        %1672 = vmatprep.subr.bf16.mxu0 0
        %1673 = vmatpush1.bf16.msra.mxu0 0
        %1674 = vmatprep.mubr.bf16.mxu0 0
        %1675 = vmatmul.mubr.bf16.gmra.mrb[0].mxu0 %v1637
        %v1676 = vpop.f32.mrb[0].mxu0
        %v1677 = vadd.f32 0.0, %v1676
        %v1678 = vpop.f32.mrb[0].mxu0
        %v1679 = vpop.f32.mrb[0].mxu0
        %v1680 = vpop.f32.mrb[0].mxu0
        %1681 = vdwg.mxu0
        %1682 = vrot.lane.b32.xlu0 %v1089, 64
        %v1683 = vpop.permute.xlu0 %1682
        %v1685 = vsel %vm1099, %v1579, 0
        %v1688 = vsel %vm1590, %v1683, 0
        %1690 = vmatprep.subr.bf16.mxu0 0
        %1691 = vmatpush1.bf16.msra.mxu0 %v1688
        %1692 = vmatprep.subr.bf16.mxu0 0
        %1693 = vmatpush1.bf16.msra.mxu0 0
        %1694 = vmatprep.subr.bf16.mxu0 0
        %1695 = vmatpush1.bf16.msra.mxu0 0
        %1696 = vmatprep.subr.bf16.mxu0 0
        %1697 = vmatpush1.bf16.msra.mxu0 0
        %1698 = vmatprep.subr.bf16.mxu0 0
        %1699 = vmatpush1.bf16.msra.mxu0 0
        %1700 = vmatprep.subr.bf16.mxu0 0
        %1701 = vmatpush1.bf16.msra.mxu0 0
        %1702 = vmatprep.subr.bf16.mxu0 0
        %1703 = vmatpush1.bf16.msra.mxu0 0
        %1704 = vmatprep.subr.bf16.mxu0 0
        %1705 = vmatpush1.bf16.msra.mxu0 0
        %1706 = vmatprep.subr.bf16.mxu0 0
        %1707 = vmatpush1.bf16.msra.mxu0 0
        %1708 = vmatprep.subr.bf16.mxu0 0
        %1709 = vmatpush1.bf16.msra.mxu0 0
        %1710 = vmatprep.subr.bf16.mxu0 0
        %1711 = vmatpush1.bf16.msra.mxu0 0
        %1712 = vmatprep.subr.bf16.mxu0 0
        %1713 = vmatpush1.bf16.msra.mxu0 0
        %1714 = vmatprep.subr.bf16.mxu0 0
        %1715 = vmatpush1.bf16.msra.mxu0 0
        %1716 = vmatprep.subr.bf16.mxu0 0
        %1717 = vmatpush1.bf16.msra.mxu0 0
        %1718 = vmatprep.subr.bf16.mxu0 0
        %1719 = vmatpush1.bf16.msra.mxu0 0
        %1720 = vmatprep.subr.bf16.mxu0 0
        %1721 = vmatpush1.bf16.msra.mxu0 0
        %1722 = vmatprep.mubr.bf16.mxu0 0
        %1723 = vmatmul.mubr.bf16.gmra.mrb[0].mxu0 %v1685
        %v1724 = vpop.f32.mrb[0].mxu0
        %v1725 = vadd.f32 0.0, %v1724
        %v1726 = vpop.f32.mrb[0].mxu0
        %v1727 = vpop.f32.mrb[0].mxu0
        %v1728 = vpop.f32.mrb[0].mxu0
        %1729 = vdwg.mxu0
        %1730 = vrot.lane.b32.xlu0 %v1090, 64
        %v1731 = vpop.permute.xlu0 %1730
        %v1733 = vsel %vm1099, %v1580, 0
        %v1736 = vsel %vm1590, %v1731, 0
        %1738 = vmatprep.subr.bf16.mxu0 0
        %1739 = vmatpush1.bf16.msra.mxu0 %v1736
        %1740 = vmatprep.subr.bf16.mxu0 0
        %1741 = vmatpush1.bf16.msra.mxu0 0
        %1742 = vmatprep.subr.bf16.mxu0 0
        %1743 = vmatpush1.bf16.msra.mxu0 0
        %1744 = vmatprep.subr.bf16.mxu0 0
        %1745 = vmatpush1.bf16.msra.mxu0 0
        %1746 = vmatprep.subr.bf16.mxu0 0
        %1747 = vmatpush1.bf16.msra.mxu0 0
        %1748 = vmatprep.subr.bf16.mxu0 0
        %1749 = vmatpush1.bf16.msra.mxu0 0
        %1750 = vmatprep.subr.bf16.mxu0 0
        %1751 = vmatpush1.bf16.msra.mxu0 0
        %1752 = vmatprep.subr.bf16.mxu0 0
        %1753 = vmatpush1.bf16.msra.mxu0 0
        %1754 = vmatprep.subr.bf16.mxu0 0
        %1755 = vmatpush1.bf16.msra.mxu0 0
        %1756 = vmatprep.subr.bf16.mxu0 0
        %1757 = vmatpush1.bf16.msra.mxu0 0
        %1758 = vmatprep.subr.bf16.mxu0 0
        %1759 = vmatpush1.bf16.msra.mxu0 0
        %1760 = vmatprep.subr.bf16.mxu0 0
        %1761 = vmatpush1.bf16.msra.mxu0 0
        %1762 = vmatprep.subr.bf16.mxu0 0
        %1763 = vmatpush1.bf16.msra.mxu0 0
        %1764 = vmatprep.subr.bf16.mxu0 0
        %1765 = vmatpush1.bf16.msra.mxu0 0
        %1766 = vmatprep.subr.bf16.mxu0 0
        %1767 = vmatpush1.bf16.msra.mxu0 0
        %1768 = vmatprep.subr.bf16.mxu0 0
        %1769 = vmatpush1.bf16.msra.mxu0 0
        %1770 = vmatprep.mubr.bf16.mxu0 0
        %1771 = vmatmul.mubr.bf16.gmra.mrb[0].mxu0 %v1733
        %v1772 = vpop.f32.mrb[0].mxu0
        %v1773 = vadd.f32 0.0, %v1772
        %v1774 = vpop.f32.mrb[0].mxu0
        %v1775 = vpop.f32.mrb[0].mxu0
        %v1776 = vpop.f32.mrb[0].mxu0
        %1777 = vdwg.mxu0
        %1778 = vrot.lane.b32.xlu0 %v1091, 64
        %v1779 = vpop.permute.xlu0 %1778
        %v1781 = vsel %vm1099, %v1581, 0
        %v1784 = vsel %vm1590, %v1779, 0
        %1786 = vmatprep.subr.bf16.mxu0 0
        %1787 = vmatpush1.bf16.msra.mxu0 %v1784
        %1788 = vmatprep.subr.bf16.mxu0 0
        %1789 = vmatpush1.bf16.msra.mxu0 0
        %1790 = vmatprep.subr.bf16.mxu0 0
        %1791 = vmatpush1.bf16.msra.mxu0 0
        %1792 = vmatprep.subr.bf16.mxu0 0
        %1793 = vmatpush1.bf16.msra.mxu0 0
        %1794 = vmatprep.subr.bf16.mxu0 0
        %1795 = vmatpush1.bf16.msra.mxu0 0
        %1796 = vmatprep.subr.bf16.mxu0 0
        %1797 = vmatpush1.bf16.msra.mxu0 0
        %1798 = vmatprep.subr.bf16.mxu0 0
        %1799 = vmatpush1.bf16.msra.mxu0 0
        %1800 = vmatprep.subr.bf16.mxu0 0
        %1801 = vmatpush1.bf16.msra.mxu0 0
        %1802 = vmatprep.subr.bf16.mxu0 0
        %1803 = vmatpush1.bf16.msra.mxu0 0
        %1804 = vmatprep.subr.bf16.mxu0 0
        %1805 = vmatpush1.bf16.msra.mxu0 0
        %1806 = vmatprep.subr.bf16.mxu0 0
        %1807 = vmatpush1.bf16.msra.mxu0 0
        %1808 = vmatprep.subr.bf16.mxu0 0
        %1809 = vmatpush1.bf16.msra.mxu0 0
        %1810 = vmatprep.subr.bf16.mxu0 0
        %1811 = vmatpush1.bf16.msra.mxu0 0
        %1812 = vmatprep.subr.bf16.mxu0 0
        %1813 = vmatpush1.bf16.msra.mxu0 0
        %1814 = vmatprep.subr.bf16.mxu0 0
        %1815 = vmatpush1.bf16.msra.mxu0 0
        %1816 = vmatprep.subr.bf16.mxu0 0
        %1817 = vmatpush1.bf16.msra.mxu0 0
        %1818 = vmatprep.mubr.bf16.mxu0 0
        %1819 = vmatmul.mubr.bf16.gmra.mrb[0].mxu0 %v1781
        %v1820 = vpop.f32.mrb[0].mxu0
        %v1821 = vadd.f32 0.0, %v1820
        %v1822 = vpop.f32.mrb[0].mxu0
        %v1823 = vpop.f32.mrb[0].mxu0
        %v1824 = vpop.f32.mrb[0].mxu0
        %1825 = vdwg.mxu0
        %1826 = vrot.lane.b32.xlu0 %v1092, 64
        %v1827 = vpop.permute.xlu0 %1826
        %v1829 = vsel %vm1099, %v1582, 0
        %v1832 = vsel %vm1590, %v1827, 0
        %1834 = vmatprep.subr.bf16.mxu0 0
        %1835 = vmatpush1.bf16.msra.mxu0 %v1832
        %1836 = vmatprep.subr.bf16.mxu0 0
        %1837 = vmatpush1.bf16.msra.mxu0 0
        %1838 = vmatprep.subr.bf16.mxu0 0
        %1839 = vmatpush1.bf16.msra.mxu0 0
        %1840 = vmatprep.subr.bf16.mxu0 0
        %1841 = vmatpush1.bf16.msra.mxu0 0
        %1842 = vmatprep.subr.bf16.mxu0 0
        %1843 = vmatpush1.bf16.msra.mxu0 0
        %1844 = vmatprep.subr.bf16.mxu0 0
        %1845 = vmatpush1.bf16.msra.mxu0 0
        %1846 = vmatprep.subr.bf16.mxu0 0
        %1847 = vmatpush1.bf16.msra.mxu0 0
        %1848 = vmatprep.subr.bf16.mxu0 0
        %1849 = vmatpush1.bf16.msra.mxu0 0
        %1850 = vmatprep.subr.bf16.mxu0 0
        %1851 = vmatpush1.bf16.msra.mxu0 0
        %1852 = vmatprep.subr.bf16.mxu0 0
        %1853 = vmatpush1.bf16.msra.mxu0 0
        %1854 = vmatprep.subr.bf16.mxu0 0
        %1855 = vmatpush1.bf16.msra.mxu0 0
        %1856 = vmatprep.subr.bf16.mxu0 0
        %1857 = vmatpush1.bf16.msra.mxu0 0
        %1858 = vmatprep.subr.bf16.mxu0 0
        %1859 = vmatpush1.bf16.msra.mxu0 0
        %1860 = vmatprep.subr.bf16.mxu0 0
        %1861 = vmatpush1.bf16.msra.mxu0 0
        %1862 = vmatprep.subr.bf16.mxu0 0
        %1863 = vmatpush1.bf16.msra.mxu0 0
        %1864 = vmatprep.subr.bf16.mxu0 0
        %1865 = vmatpush1.bf16.msra.mxu0 0
        %1866 = vmatprep.mubr.bf16.mxu0 0
        %1867 = vmatmul.mubr.bf16.gmra.mrb[0].mxu0 %v1829
        %v1868 = vpop.f32.mrb[0].mxu0
        %v1869 = vadd.f32 0.0, %v1868
        %v1870 = vpop.f32.mrb[0].mxu0
        %v1871 = vpop.f32.mrb[0].mxu0
        %v1872 = vpop.f32.mrb[0].mxu0
        %1873 = vdwg.mxu0
        %1874 = vrot.lane.b32.xlu0 %v1093, 64
        %v1875 = vpop.permute.xlu0 %1874
        %v1877 = vsel %vm1099, %v1583, 0
        %v1880 = vsel %vm1590, %v1875, 0
        %1882 = vmatprep.subr.bf16.mxu0 0
        %1883 = vmatpush1.bf16.msra.mxu0 %v1880
        %1884 = vmatprep.subr.bf16.mxu0 0
        %1885 = vmatpush1.bf16.msra.mxu0 0
        %1886 = vmatprep.subr.bf16.mxu0 0
        %1887 = vmatpush1.bf16.msra.mxu0 0
        %1888 = vmatprep.subr.bf16.mxu0 0
        %1889 = vmatpush1.bf16.msra.mxu0 0
        %1890 = vmatprep.subr.bf16.mxu0 0
        %1891 = vmatpush1.bf16.msra.mxu0 0
        %1892 = vmatprep.subr.bf16.mxu0 0
        %1893 = vmatpush1.bf16.msra.mxu0 0
        %1894 = vmatprep.subr.bf16.mxu0 0
        %1895 = vmatpush1.bf16.msra.mxu0 0
        %1896 = vmatprep.subr.bf16.mxu0 0
        %1897 = vmatpush1.bf16.msra.mxu0 0
        %1898 = vmatprep.subr.bf16.mxu0 0
        %1899 = vmatpush1.bf16.msra.mxu0 0
        %1900 = vmatprep.subr.bf16.mxu0 0
        %1901 = vmatpush1.bf16.msra.mxu0 0
        %1902 = vmatprep.subr.bf16.mxu0 0
        %1903 = vmatpush1.bf16.msra.mxu0 0
        %1904 = vmatprep.subr.bf16.mxu0 0
        %1905 = vmatpush1.bf16.msra.mxu0 0
        %1906 = vmatprep.subr.bf16.mxu0 0
        %1907 = vmatpush1.bf16.msra.mxu0 0
        %1908 = vmatprep.subr.bf16.mxu0 0
        %1909 = vmatpush1.bf16.msra.mxu0 0
        %1910 = vmatprep.subr.bf16.mxu0 0
        %1911 = vmatpush1.bf16.msra.mxu0 0
        %1912 = vmatprep.subr.bf16.mxu0 0
        %1913 = vmatpush1.bf16.msra.mxu0 0
        %1914 = vmatprep.mubr.bf16.mxu0 0
        %1915 = vmatmul.mubr.bf16.gmra.mrb[0].mxu0 %v1877
        %v1916 = vpop.f32.mrb[0].mxu0
        %v1917 = vadd.f32 0.0, %v1916
        %v1918 = vpop.f32.mrb[0].mxu0
        %v1919 = vpop.f32.mrb[0].mxu0
        %v1920 = vpop.f32.mrb[0].mxu0
        %1921 = vdwg.mxu0
        %1922 = vrot.lane.b32.xlu0 %v1094, 64
        %v1923 = vpop.permute.xlu0 %1922
        %v1925 = vsel %vm1099, %v1584, 0
        %v1928 = vsel %vm1590, %v1923, 0
        %1930 = vmatprep.subr.bf16.mxu0 0
        %1931 = vmatpush1.bf16.msra.mxu0 %v1928
        %1932 = vmatprep.subr.bf16.mxu0 0
        %1933 = vmatpush1.bf16.msra.mxu0 0
        %1934 = vmatprep.subr.bf16.mxu0 0
        %1935 = vmatpush1.bf16.msra.mxu0 0
        %1936 = vmatprep.subr.bf16.mxu0 0
        %1937 = vmatpush1.bf16.msra.mxu0 0
        %1938 = vmatprep.subr.bf16.mxu0 0
        %1939 = vmatpush1.bf16.msra.mxu0 0
        %1940 = vmatprep.subr.bf16.mxu0 0
        %1941 = vmatpush1.bf16.msra.mxu0 0
        %1942 = vmatprep.subr.bf16.mxu0 0
        %1943 = vmatpush1.bf16.msra.mxu0 0
        %1944 = vmatprep.subr.bf16.mxu0 0
        %1945 = vmatpush1.bf16.msra.mxu0 0
        %1946 = vmatprep.subr.bf16.mxu0 0
        %1947 = vmatpush1.bf16.msra.mxu0 0
        %1948 = vmatprep.subr.bf16.mxu0 0
        %1949 = vmatpush1.bf16.msra.mxu0 0
        %1950 = vmatprep.subr.bf16.mxu0 0
        %1951 = vmatpush1.bf16.msra.mxu0 0
        %1952 = vmatprep.subr.bf16.mxu0 0
        %1953 = vmatpush1.bf16.msra.mxu0 0
        %1954 = vmatprep.subr.bf16.mxu0 0
        %1955 = vmatpush1.bf16.msra.mxu0 0
        %1956 = vmatprep.subr.bf16.mxu0 0
        %1957 = vmatpush1.bf16.msra.mxu0 0
        %1958 = vmatprep.subr.bf16.mxu0 0
        %1959 = vmatpush1.bf16.msra.mxu0 0
        %1960 = vmatprep.subr.bf16.mxu0 0
        %1961 = vmatpush1.bf16.msra.mxu0 0
        %1962 = vmatprep.mubr.bf16.mxu0 0
        %1963 = vmatmul.mubr.bf16.gmra.mrb[0].mxu0 %v1925
        %v1964 = vpop.f32.mrb[0].mxu0
        %v1965 = vadd.f32 0.0, %v1964
        %v1966 = vpop.f32.mrb[0].mxu0
        %v1967 = vpop.f32.mrb[0].mxu0
        %v1968 = vpop.f32.mrb[0].mxu0
        %1969 = vdwg.mxu0
        %1972 = vrot.lane.b32.xlu0 %v1725, 8
        %v1973 = vpop.permute.xlu0 %1972
        %1974 = vrot.lane.b32.xlu0 %v1773, 8
        %v1975 = vpop.permute.xlu0 %1974
        %1980 = vrot.lane.b32.xlu0 %v1821, 16
        %v1981 = vpop.permute.xlu0 %1980
        %1982 = vrot.lane.b32.xlu0 %v1869, 16
        %v1983 = vpop.permute.xlu0 %1982
        %1988 = vrot.lane.b32.xlu0 %v1917, 24
        %v1989 = vpop.permute.xlu0 %1988
        %1990 = vrot.lane.b32.xlu0 %v1965, 24
        %v1991 = vpop.permute.xlu0 %1990
        %v1994 = vsel %vm1099, %v1629, %v1973
        %v1995 = vsel %vm1099, %v1677, %v1975
        %vm1996 = vcmask 130048
        %v1997 = vsel %vm1996, %v1994, %v1981
        %v1998 = vsel %vm1996, %v1995, %v1983
        %vm1999 = vcmask 195584
        %v2000 = vsel %vm1999, %v1997, %v1989
        %v2001 = vsel %vm1999, %v1998, %v1991
        %v2002 = vpack.c.bf16 %v2001, %v2000
        %v2003 = vld [vmem:[%s780] sm:$0xf]
        %v2004 = vld [vmem:[%s780 + $0x4] sm:$0xf]
        %v2005 = vld [vmem:[%s780 + $0x8] sm:$0xf]
        %v2006 = vld [vmem:[%s780 + $0xc] sm:$0xf]
        %v2007 = vld [vmem:[%s788] sm:$0x1]
        %v2009 = vlaneseq
        %v2010 = vshrl.u32 %v2009, 7
        %v2011 = vsub.s32 0, %v2010
        %v2012 = vrot.slane %v2007, %v2011
        %v2018 = vunpack.c.l.b16 %v2003
        %v2019 = vunpack.c.l.b16 %v2004
        %v2020 = vunpack.c.l.b16 %v2005
        %v2021 = vunpack.c.l.b16 %v2006
        %v2022 = vpack.c.b16 %v2019, %v2018
        %v2023 = vpack.c.b16 %v2021, %v2020
        %v2027 = vsel %vm951, %v2002, 0
        %2029 = vmatprep.subr.bf16.mxu0 0
        %2030 = vmatpush1.bf16.msra.mxu0 %v2022
        %2031 = vmatprep.subr.bf16.mxu0 0
        %2032 = vmatpush1.bf16.msra.mxu0 %v2023
        %2033 = vmatprep.subr.bf16.mxu0 0
        %2034 = vmatpush1.bf16.msra.mxu0 0
        %2035 = vmatprep.subr.bf16.mxu0 0
        %2036 = vmatpush1.bf16.msra.mxu0 0
        %2037 = vmatprep.subr.bf16.mxu0 0
        %2038 = vmatpush1.bf16.msra.mxu0 0
        %2039 = vmatprep.subr.bf16.mxu0 0
        %2040 = vmatpush1.bf16.msra.mxu0 0
        %2041 = vmatprep.subr.bf16.mxu0 0
        %2042 = vmatpush1.bf16.msra.mxu0 0
        %2043 = vmatprep.subr.bf16.mxu0 0
        %2044 = vmatpush1.bf16.msra.mxu0 0
        %2045 = vmatprep.subr.bf16.mxu0 0
        %2046 = vmatpush1.bf16.msra.mxu0 0
        %2047 = vmatprep.subr.bf16.mxu0 0
        %2048 = vmatpush1.bf16.msra.mxu0 0
        %2049 = vmatprep.subr.bf16.mxu0 0
        %2050 = vmatpush1.bf16.msra.mxu0 0
        %2051 = vmatprep.subr.bf16.mxu0 0
        %2052 = vmatpush1.bf16.msra.mxu0 0
        %2053 = vmatprep.subr.bf16.mxu0 0
        %2054 = vmatpush1.bf16.msra.mxu0 0
        %2055 = vmatprep.subr.bf16.mxu0 0
        %2056 = vmatpush1.bf16.msra.mxu0 0
        %2057 = vmatprep.subr.bf16.mxu0 0
        %2058 = vmatpush1.bf16.msra.mxu0 0
        %2059 = vmatprep.subr.bf16.mxu0 0
        %2060 = vmatpush1.bf16.msra.mxu0 0
        %2061 = vmatprep.mubr.bf16.mxu0 0
        %2062 = vmatmul.mubr.bf16.gmra.mrb[0].mxu0 %v2027
        %v2063 = vpop.f32.mrb[0].mxu0
        %v2064 = vadd.f32 %v2012, %v2063
        %v2065 = vpop.f32.mrb[0].mxu0
        %v2066 = vpop.f32.mrb[0].mxu0
        %v2067 = vadd.f32 %v2012, %v2066
        %v2068 = vpop.f32.mrb[0].mxu0
        %2069 = vdwg.mxu0
        %v2070 = vadd.f32 %v947, %v2064
        %v2071 = vadd.f32 %v948, %v2067
        %v2072 = vld [vmem:[%s796] sm:$0x1]
        %v2073 = vld [vmem:[%s804] sm:$0x1]
        %v2074 = vsel %vm951, %v2070, 0.0
        %2075 = vadd.xlane.f32.xlu0 %v2074
        %v2076 = vpop.xlane.xlu0 %2075
        %v2077 = vsel %vm951, %v2071, 0.0
        %2078 = vadd.xlane.f32.xlu0 %v2077
        %v2079 = vpop.xlane.xlu0 %2078
        %v2080 = vmul.f32 %v2076, %v958
        %v2081 = vmul.f32 %v2079, %v958
        %v2082 = vmul.f32 %v2070, %v2070
        %v2083 = vmul.f32 %v2071, %v2071
        %v2084 = vsel %vm951, %v2082, 0.0
        %2085 = vadd.xlane.f32.xlu0 %v2084
        %v2086 = vpop.xlane.xlu0 %2085
        %v2087 = vsel %vm951, %v2083, 0.0
        %2088 = vadd.xlane.f32.xlu0 %v2087
        %v2089 = vpop.xlane.xlu0 %2088
        %v2090 = vmul.f32 %v2086, %v958
        %v2091 = vmul.f32 %v2089, %v958
        %v2092 = vmul.f32 %v2080, %v2080
        %v2093 = vmul.f32 %v2081, %v2081
        %v2094 = vsub.f32 %v2090, %v2092
        %v2095 = vsub.f32 %v2091, %v2093
        %v2096 = vsub.f32 %v2070, %v2080
        %v2097 = vsub.f32 %v2071, %v2081
        %v2098 = vadd.f32 %v2094, 1e-05
        %v2099 = vadd.f32 %v2095, 1e-05
        %v2100 = vrsqrt.pop %v2098
        %v2101 = vrsqrt.pop %v2099
        %v2102 = vmul.f32 %v2096, %v2100
        %v2103 = vmul.f32 %v2097, %v2101
        %v2105 = vlaneseq
        %v2106 = vshrl.u32 %v2105, 7
        %v2107 = vsub.s32 0, %v2106
        %v2108 = vrot.slane %v2072, %v2107
        %v2110 = vmul.f32 %v2102, %v2108
        %v2111 = vmul.f32 %v2103, %v2108
        %v2113 = vlaneseq
        %v2114 = vshrl.u32 %v2113, 7
        %v2115 = vsub.s32 0, %v2114
        %v2116 = vrot.slane %v2073, %v2115
        %v2118 = vadd.f32 %v2110, %v2116
        %v2119 = vadd.f32 %v2111, %v2116
        %v2120 = vpack.c.bf16 %v2119, %v2118
        %v2121 = vld [vmem:[%s813] sm:$0xf]
        %v2122 = vld [vmem:[%s813 + $0x4] sm:$0xf]
        %v2123 = vld [vmem:[%s813 + $0x8] sm:$0xf]
        %v2124 = vld [vmem:[%s813 + $0xc] sm:$0xf]
        %v2125 = vld [vmem:[%s821] sm:$0x1]
        %v2127 = vlaneseq
        %v2128 = vshrl.u32 %v2127, 7
        %v2129 = vsub.s32 0, %v2128
        %v2130 = vrot.slane %v2125, %v2129
        %v2136 = vunpack.c.l.b16 %v2121
        %v2137 = vunpack.c.l.b16 %v2122
        %v2138 = vunpack.c.l.b16 %v2123
        %v2139 = vunpack.c.l.b16 %v2124
        %v2140 = vpack.c.b16 %v2137, %v2136
        %v2141 = vpack.c.b16 %v2139, %v2138
        %v2145 = vsel %vm951, %v2120, 0
        %2147 = vmatprep.subr.bf16.mxu0 0
        %2148 = vmatpush1.bf16.msra.mxu0 %v2140
        %2149 = vmatprep.subr.bf16.mxu0 0
        %2150 = vmatpush1.bf16.msra.mxu0 %v2141
        %2151 = vmatprep.subr.bf16.mxu0 0
        %2152 = vmatpush1.bf16.msra.mxu0 0
        %2153 = vmatprep.subr.bf16.mxu0 0
        %2154 = vmatpush1.bf16.msra.mxu0 0
        %2155 = vmatprep.subr.bf16.mxu0 0
        %2156 = vmatpush1.bf16.msra.mxu0 0
        %2157 = vmatprep.subr.bf16.mxu0 0
        %2158 = vmatpush1.bf16.msra.mxu0 0
        %2159 = vmatprep.subr.bf16.mxu0 0
        %2160 = vmatpush1.bf16.msra.mxu0 0
        %2161 = vmatprep.subr.bf16.mxu0 0
        %2162 = vmatpush1.bf16.msra.mxu0 0
        %2163 = vmatprep.subr.bf16.mxu0 0
        %2164 = vmatpush1.bf16.msra.mxu0 0
        %2165 = vmatprep.subr.bf16.mxu0 0
        %2166 = vmatpush1.bf16.msra.mxu0 0
        %2167 = vmatprep.subr.bf16.mxu0 0
        %2168 = vmatpush1.bf16.msra.mxu0 0
        %2169 = vmatprep.subr.bf16.mxu0 0
        %2170 = vmatpush1.bf16.msra.mxu0 0
        %2171 = vmatprep.subr.bf16.mxu0 0
        %2172 = vmatpush1.bf16.msra.mxu0 0
        %2173 = vmatprep.subr.bf16.mxu0 0
        %2174 = vmatpush1.bf16.msra.mxu0 0
        %2175 = vmatprep.subr.bf16.mxu0 0
        %2176 = vmatpush1.bf16.msra.mxu0 0
        %2177 = vmatprep.subr.bf16.mxu0 0
        %2178 = vmatpush1.bf16.msra.mxu0 0
        %2179 = vmatprep.mubr.bf16.mxu0 0
        %2180 = vmatmul.mubr.bf16.gmra.mrb[0].mxu0 %v2145
        %v2181 = vpop.f32.mrb[0].mxu0
        %v2182 = vadd.f32 %v2130, %v2181
        %v2183 = vpop.f32.mrb[0].mxu0
        %v2184 = vpop.f32.mrb[0].mxu0
        %v2185 = vadd.f32 %v2130, %v2184
        %v2186 = vpop.f32.mrb[0].mxu0
        %2187 = vdwg.mxu0
        %v2188 = vmul.f32 %v2182, 1.702
        %v2189 = vmul.f32 %v2185, 1.702
        %v2190 = vxor.u32 %v2188, 2147483648
        %v2191 = vxor.u32 %v2189, 2147483648
        %v2192 = vmul.f32 %v2190, 1.442695
        %v2193 = vpow.pop %v2192
        %v2194 = vmul.f32 %v2191, 1.442695
        %v2195 = vpow.pop %v2194
        %v2196 = vadd.f32 %v2193, 1.0
        %v2197 = vadd.f32 %v2195, 1.0
        %v2198 = vrcp.pop %v2196
        %v2199 = vmul.f32 1.0, %v2198
        %v2200 = vrcp.pop %v2197
        %v2201 = vmul.f32 1.0, %v2200
        %v2202 = vmul.f32 %v2182, %v2199
        %v2203 = vmul.f32 %v2185, %v2201
        %v2204 = vpack.c.bf16 %v2203, %v2202
        %v2205 = vld [vmem:[%s830] sm:$0xf]
        %v2206 = vld [vmem:[%s830 + $0x4] sm:$0xf]
        %v2207 = vld [vmem:[%s830 + $0x8] sm:$0xf]
        %v2208 = vld [vmem:[%s830 + $0xc] sm:$0xf]
        %v2209 = vld [vmem:[%s830 + $0x10] sm:$0xf]
        %v2210 = vld [vmem:[%s830 + $0x14] sm:$0xf]
        %v2211 = vld [vmem:[%s830 + $0x18] sm:$0xf]
        %v2212 = vld [vmem:[%s830 + $0x1c] sm:$0xf]
        %v2213 = vld [vmem:[%s830 + $0x20] sm:$0xf]
        %v2214 = vld [vmem:[%s830 + $0x24] sm:$0xf]
        %v2215 = vld [vmem:[%s830 + $0x28] sm:$0xf]
        %v2216 = vld [vmem:[%s830 + $0x2c] sm:$0xf]
        %v2217 = vld [vmem:[%s830 + $0x30] sm:$0xf]
        %v2218 = vld [vmem:[%s830 + $0x34] sm:$0xf]
        %v2219 = vld [vmem:[%s830 + $0x38] sm:$0xf]
        %v2220 = vld [vmem:[%s830 + $0x3c] sm:$0xf]
        %v2221 = vld [vmem:[%s838] sm:$0x1]
        %v2223 = vlaneseq
        %v2224 = vshrl.u32 %v2223, 7
        %v2225 = vsub.s32 0, %v2224
        %v2226 = vrot.slane %v2221, %v2225
        %v2244 = vunpack.c.l.b16 %v2205
        %v2245 = vunpack.c.l.b16 %v2206
        %v2246 = vunpack.c.l.b16 %v2207
        %v2247 = vunpack.c.l.b16 %v2208
        %v2248 = vunpack.c.l.b16 %v2209
        %v2249 = vunpack.c.l.b16 %v2210
        %v2250 = vunpack.c.l.b16 %v2211
        %v2251 = vunpack.c.l.b16 %v2212
        %v2252 = vunpack.c.l.b16 %v2213
        %v2253 = vunpack.c.l.b16 %v2214
        %v2254 = vunpack.c.l.b16 %v2215
        %v2255 = vunpack.c.l.b16 %v2216
        %v2256 = vunpack.c.l.b16 %v2217
        %v2257 = vunpack.c.l.b16 %v2218
        %v2258 = vunpack.c.l.b16 %v2219
        %v2259 = vunpack.c.l.b16 %v2220
        %v2260 = vpack.c.b16 %v2245, %v2244
        %v2261 = vpack.c.b16 %v2247, %v2246
        %v2262 = vpack.c.b16 %v2249, %v2248
        %v2263 = vpack.c.b16 %v2251, %v2250
        %v2264 = vpack.c.b16 %v2253, %v2252
        %v2265 = vpack.c.b16 %v2255, %v2254
        %v2266 = vpack.c.b16 %v2257, %v2256
        %v2267 = vpack.c.b16 %v2259, %v2258
        %2276 = vmatprep.subr.bf16.mxu0 0
        %2277 = vmatpush1.bf16.msra.mxu0 %v2260
        %2278 = vmatprep.subr.bf16.mxu0 0
        %2279 = vmatpush1.bf16.msra.mxu0 %v2261
        %2280 = vmatprep.subr.bf16.mxu0 0
        %2281 = vmatpush1.bf16.msra.mxu0 %v2262
        %2282 = vmatprep.subr.bf16.mxu0 0
        %2283 = vmatpush1.bf16.msra.mxu0 %v2263
        %2284 = vmatprep.subr.bf16.mxu0 0
        %2285 = vmatpush1.bf16.msra.mxu0 %v2264
        %2286 = vmatprep.subr.bf16.mxu0 0
        %2287 = vmatpush1.bf16.msra.mxu0 %v2265
        %2288 = vmatprep.subr.bf16.mxu0 0
        %2289 = vmatpush1.bf16.msra.mxu0 %v2266
        %2290 = vmatprep.subr.bf16.mxu0 0
        %2291 = vmatpush1.bf16.msra.mxu0 %v2267
        %2292 = vmatprep.subr.bf16.mxu0 0
        %2293 = vmatpush1.bf16.msra.mxu0 0
        %2294 = vmatprep.subr.bf16.mxu0 0
        %2295 = vmatpush1.bf16.msra.mxu0 0
        %2296 = vmatprep.subr.bf16.mxu0 0
        %2297 = vmatpush1.bf16.msra.mxu0 0
        %2298 = vmatprep.subr.bf16.mxu0 0
        %2299 = vmatpush1.bf16.msra.mxu0 0
        %2300 = vmatprep.subr.bf16.mxu0 0
        %2301 = vmatpush1.bf16.msra.mxu0 0
        %2302 = vmatprep.subr.bf16.mxu0 0
        %2303 = vmatpush1.bf16.msra.mxu0 0
        %2304 = vmatprep.subr.bf16.mxu0 0
        %2305 = vmatpush1.bf16.msra.mxu0 0
        %2306 = vmatprep.subr.bf16.mxu0 0
        %2307 = vmatpush1.bf16.msra.mxu0 0
        %2308 = vmatprep.mubr.bf16.mxu0 0
        %2309 = vmatmul.mubr.bf16.gmra.mrb[0].mxu0 %v2204
        %v2310 = vpop.f32.mrb[0].mxu0
        %v2311 = vadd.f32 %v2226, %v2310
        %v2312 = vpop.f32.mrb[0].mxu0
        %v2313 = vpop.f32.mrb[0].mxu0
        %v2314 = vadd.f32 %v2226, %v2313
        %v2315 = vpop.f32.mrb[0].mxu0
        %2316 = vdwg.mxu0
        %v2317 = vadd.f32 %v2070, %v2311
        %v2318 = vadd.f32 %v2071, %v2314
        %2319 = vst.msk [vmem:[#allocation2] sm:$0xff] %vm951, %v2317
        %2320 = vst.msk [vmem:[#allocation2 + $0x8] sm:$0xff] %vm951, %v2318
        %p2321 = scmp.eq.s32.totalorder %s31, 1
        // Predicated region
        $region153: #{tpu_custom_call.1} parent=83 // pred_check
          %p2322 = pneg %p2321
        $region154: #{tpu_custom_call.1} parent=83 // pred_check_branch
          %2324 = sbr.rel (%p2322) target = $region156
        $region155: #{tpu_custom_call.1} parent=83 // pred_region
          %v2325 = vld [vmem:[#allocation20] sm:$0x1]
          %v2326 = vld [vmem:[#allocation21] sm:$0x1]
          %v2327 = vsel %vm951, %v2317, 0.0
          %2328 = vadd.xlane.f32.xlu0 %v2327
          %v2329 = vpop.xlane.xlu0 %2328
          %v2330 = vsel %vm951, %v2318, 0.0
          %2331 = vadd.xlane.f32.xlu0 %v2330
          %v2332 = vpop.xlane.xlu0 %2331
          %v2333 = vmul.f32 %v2329, %v958
          %v2334 = vmul.f32 %v2332, %v958
          %v2335 = vmul.f32 %v2317, %v2317
          %v2336 = vmul.f32 %v2318, %v2318
          %v2337 = vsel %vm951, %v2335, 0.0
          %2338 = vadd.xlane.f32.xlu0 %v2337
          %v2339 = vpop.xlane.xlu0 %2338
          %v2340 = vsel %vm951, %v2336, 0.0
          %2341 = vadd.xlane.f32.xlu0 %v2340
          %v2342 = vpop.xlane.xlu0 %2341
          %v2343 = vmul.f32 %v2339, %v958
          %v2344 = vmul.f32 %v2342, %v958
          %v2345 = vmul.f32 %v2333, %v2333
          %v2346 = vmul.f32 %v2334, %v2334
          %v2347 = vsub.f32 %v2343, %v2345
          %v2348 = vsub.f32 %v2344, %v2346
          %v2349 = vsub.f32 %v2317, %v2333
          %v2350 = vsub.f32 %v2318, %v2334
          %v2351 = vadd.f32 %v2347, 1e-05
          %v2352 = vadd.f32 %v2348, 1e-05
          %v2353 = vrsqrt.pop %v2351
          %v2354 = vrsqrt.pop %v2352
          %v2355 = vmul.f32 %v2349, %v2353
          %v2356 = vmul.f32 %v2350, %v2354
          %v2358 = vlaneseq
          %v2359 = vshrl.u32 %v2358, 7
          %v2360 = vsub.s32 0, %v2359
          %v2361 = vrot.slane %v2325, %v2360
          %v2363 = vmul.f32 %v2355, %v2361
          %v2364 = vmul.f32 %v2356, %v2361
          %v2366 = vlaneseq
          %v2367 = vshrl.u32 %v2366, 7
          %v2368 = vsub.s32 0, %v2367
          %v2369 = vrot.slane %v2326, %v2368
          %v2371 = vadd.f32 %v2363, %v2369
          %v2372 = vadd.f32 %v2364, %v2369
          %2373 = vst.msk [vmem:[#allocation23] sm:$0xff] %vm951, %v2371
          %2374 = vst.msk [vmem:[#allocation23 + $0x8] sm:$0xff] %vm951, %v2372
        $region156: #{tpu_custom_call.1} parent=83 // pred_fallthru
          _
        // Predicated region
        $region157: #{tpu_custom_call.1} parent=83 // pred_check
          %p2375 = pneg %p440
        $region158: #{tpu_custom_call.1} parent=83 // pred_check_branch
          %2377 = sbr.rel (%p2375) target = $region160
        $region159: #{tpu_custom_call.1} parent=83 // pred_region
          %s2379 = ssub.s32 256, 256
          %2380 = vsyncadd [#allocation5], %s2379
          %s2381 = sshll.u32 [#allocation23], 4
          %s2382 = int_to_ptr.vmem [resolvable:$true] %s2381
          %2387 = dma.vmem_to_hbm [thread:$0]  %s2382, 256, %s16, [#allocation5], 128, 128, 8
        $region160: #{tpu_custom_call.1} parent=83 // pred_fallthru
          _
        // Predicated region
        $region161: #{tpu_custom_call.1} parent=83 // pred_check
          %p2388 = pneg %p440
        $region162: #{tpu_custom_call.1} parent=83 // pred_check_branch
          %2390 = sbr.rel (%p2388) target = $region164
        $region163: #{tpu_custom_call.1} parent=83 // pred_region
          %2391 = dma.done [#allocation5], 256
        $region164: #{tpu_custom_call.1} parent=83 // pred_fallthru
          _
      $region84: #{tpu_custom_call.1} parent=5 // pred_fallthru
        _
      %p2392 = scmp.le.s32.totalorder 2, %s26
      // Predicated region
      $region165: #{tpu_custom_call.1} parent=5 // pred_check
        %p2393 = pneg %p2392
      $region166: #{tpu_custom_call.1} parent=5 // pred_check_branch
        %2395 = sbr.rel (%p2393) target = $region168
      $region167: #{tpu_custom_call.1} parent=5 // pred_region
        %s2396 = ssub.s32 %s26, 2
      $region168: #{tpu_custom_call.1} parent=5 // pred_fallthru
        _
    $region6: #{tpu_custom_call.1} parent=1 // loop_footer
      %s30 = sadd.s32 1, %s26
    $region7: #{tpu_custom_call.1} parent=1 // loop_footer_branch
      %25 = sbr.rel target = $region3
    $region8: #{tpu_custom_call.1} parent=1 // loop_exit
      _
    %2397 = vsyncpa [#allocation4], 1
    %s2398 = scalar_lea.sflag [#allocation4], 1
    %2399 = vsyncpa %s2398, 1
    %2400 = vsyncpa [#allocation7], 1
    %2401 = vsyncpa [#allocation22], 1
    %2402 = vsyncpa [#allocation5], 1
    %s2403 = scalar_lea.sflag [#allocation5], 1
    %2404 = vsyncpa %s2403, 1

</llo_original>
